<compile_context>
chip_gen: v7x
topology: tpu7x:2x2x1
jax: 0.10.0
libtpu: 0.0.40
codegen_flags: <defaults>
</compile_context>

<pallas_src>
import math
from functools import partial

import jax
import jax.numpy as jnp
from jax.experimental import pallas as pl
from jax.experimental.pallas import tpu as pltpu

SLOPE = 0.2


def _leaky_relu(x):
    return jnp.where(x >= 0, x, SLOPE * x)


def disc_kernel(x_ref,
                w1_ref, b1_ref,
                w2_ref, b2_ref,
                w3t_ref, b3_ref,
                w4_ref, b4_ref,
                o_ref):
    x = x_ref[...]                                                    # (tm, 512) bf16

    h1 = jnp.dot(x, w1_ref[...], preferred_element_type=jnp.float32)
    h1 = _leaky_relu(h1 + b1_ref[...])                                # (tm, 256) f32

    h2 = jnp.dot(h1.astype(jnp.bfloat16), w2_ref[...],
                 preferred_element_type=jnp.float32)
    h2 = _leaky_relu(h2 + b2_ref[...])                                # (tm, 128) f32

    # Run the tail of the network transposed (batch lands on the lane axis) so
    # the logits come out as a lane-dense (1, tm) row vector for the store.
    h2t = h2.T.astype(jnp.bfloat16)                                   # (128, tm) bf16
    h3t = jnp.dot(w3t_ref[...], h2t, preferred_element_type=jnp.float32)
    h3t = _leaky_relu(h3t + b3_ref[...])                              # (64, tm) f32

    # 64 -> 1 layer as VPU multiply + cross-sublane reduction (no N=1 matmul).
    logits = jnp.sum(h3t * w4_ref[...], axis=0, keepdims=True) + b4_ref[...]  # (1, tm)
    o_ref[...] = jax.nn.sigmoid(logits).astype(o_ref.dtype)


def _const_spec(arr):
    # Whole array, same block every grid step (Pallas skips the re-DMA since
    # the block index never changes).
    zeros = (0,) * arr.ndim
    return pl.BlockSpec(arr.shape, lambda i, _z=zeros: _z)


@partial(jax.jit, static_argnames=("tm",))
def discriminator_forward(x, params, *, tm=256):
    """x: (B, 512) float32 -> (B, 1) float32.  tm must be a multiple of 128."""
    (w1, b1), (w2, b2), (w3, b3), (w4, b4) = params
    B, D = x.shape
    if D != 512:
        raise ValueError(f"expected 512 input features, got {D}")
    if tm % 128 != 0:
        raise ValueError("tm must be a multiple of 128")

    n_tiles = pl.cdiv(B, tm)
    b_pad = n_tiles * tm

    xb = x.astype(jnp.bfloat16)
    if b_pad != B:
        xb = jnp.pad(xb, ((0, b_pad - B), (0, 0)))

    # MXU operands in bf16; biases / final column stay f32.
    w1b = w1.astype(jnp.bfloat16)          # (512, 256)
    w2b = w2.astype(jnp.bfloat16)          # (256, 128)
    w3t = w3.T.astype(jnp.bfloat16)        # (64, 128)   (out, in) orientation
    b3c = b3.reshape(-1, 1)                # (64, 1) f32, broadcasts over lanes
    # w4 is already a (64, 1) column, b4 is (1, 1).

    in_specs = [
        pl.BlockSpec((tm, 512), lambda i: (i, 0)),
        _const_spec(w1b), _const_spec(b1),
        _const_spec(w2b), _const_spec(b2),
        _const_spec(w3t), _const_spec(b3c),
        _const_spec(w4), _const_spec(b4),
    ]
    out_spec = pl.BlockSpec((1, tm), lambda i: (0, i))

    out_row = pl.pallas_call(
        disc_kernel,
        out_shape=jax.ShapeDtypeStruct((1, b_pad), jnp.float32),
        grid_spec=pltpu.PrefetchScalarGridSpec(
            num_scalar_prefetch=0,
            grid=(n_tiles,),
            in_specs=in_specs,
            out_specs=out_spec,
        ),
        compiler_params=pltpu.CompilerParams(
            dimension_semantics=("parallel",)),
    )(xb, w1b, b1, w2b, b2, w3t, b3c, w4, b4)

    return out_row[0, :B].reshape(B, 1)


def init_params(key):
    """Kaiming-normal (a=0.2, fan_in) weights, zero biases, like the PyTorch init."""
    dims = [(512, 256), (256, 128), (128, 64), (64, 1)]
    gain = math.sqrt(2.0 / (1.0 + SLOPE ** 2))
    params = []
    for (fan_in, fan_out) in dims:
        key, sub = jax.random.split(key)
        std = gain / math.sqrt(fan_in)
        # stored as (in, out); equivalent to PyTorch (out, in) weight transposed
        w = std * jax.random.normal(sub, (fan_in, fan_out), dtype=jnp.float32)
        b = jnp.zeros((1, fan_out), dtype=jnp.float32)
        params.append((w, b))
    return params


def _reference_forward(x, params):
    """Pure-JAX f32 reference matching the PyTorch module."""
    h = x
    for i, (w, b) in enumerate(params):
        h = h @ w + b
        if i < 3:
            h = _leaky_relu(h)
    return jax.nn.sigmoid(h)


if __name__ == "__main__":
    key = jax.random.PRNGKey(0)
    pkey, xkey = jax.random.split(key)
    params = init_params(pkey)

    B = 300  # not a multiple of tm -> exercises the padding path, 2 grid steps
    x = jax.random.normal(xkey, (B, 512), dtype=jnp.float32)

    out = discriminator_forward(x, params, tm=256)
    out = jax.block_until_ready(out)

    assert out.shape == (B, 1) and out.dtype == jnp.float32
    ref = _reference_forward(x, params)
    max_err = float(jnp.max(jnp.abs(out - ref)))
    assert max_err < 5e-2, f"max |pallas - ref| = {max_err}"
    assert bool(jnp.all((out > 0.0) & (out < 1.0)))
    print("KERNEL_OK")
</pallas_src>

<mosaic_0001>
module attributes {stable_mosaic.version = 11 : i64} {
  func.func @disc_kernel(%arg0: i32, %arg1: memref<256x512xbf16, #tpu.memory_space<vmem>>, %arg2: memref<512x256xbf16, #tpu.memory_space<vmem>>, %arg3: memref<1x256xf32, #tpu.memory_space<vmem>>, %arg4: memref<256x128xbf16, #tpu.memory_space<vmem>>, %arg5: memref<1x128xf32, #tpu.memory_space<vmem>>, %arg6: memref<64x128xbf16, #tpu.memory_space<vmem>>, %arg7: memref<64x1xf32, #tpu.memory_space<vmem>>, %arg8: memref<64x1xf32, #tpu.memory_space<vmem>>, %arg9: memref<1x1xf32, #tpu.memory_space<vmem>>, %arg10: memref<1x256xf32, #tpu.memory_space<vmem>>) attributes {dimension_semantics = [#tpu.dimension_semantics<parallel>], iteration_bounds = array<i64: 2>, scalar_prefetch = 0 : i64, scratch_operands = 0 : i64, tpu.core_type = #tpu.core_type<tc>, window_params = [{transform_indices = @transform_0, window_bounds = array<i64: 256, 512>}, {pipeline_mode = #tpu.pipeline_mode<synchronous>, transform_indices = @transform_1, window_bounds = array<i64: 512, 256>}, {pipeline_mode = #tpu.pipeline_mode<synchronous>, transform_indices = @transform_2, window_bounds = array<i64: 1, 256>}, {pipeline_mode = #tpu.pipeline_mode<synchronous>, transform_indices = @transform_3, window_bounds = array<i64: 256, 128>}, {pipeline_mode = #tpu.pipeline_mode<synchronous>, transform_indices = @transform_4, window_bounds = array<i64: 1, 128>}, {pipeline_mode = #tpu.pipeline_mode<synchronous>, transform_indices = @transform_5, window_bounds = array<i64: 64, 128>}, {pipeline_mode = #tpu.pipeline_mode<synchronous>, transform_indices = @transform_6, window_bounds = array<i64: 64, 1>}, {pipeline_mode = #tpu.pipeline_mode<synchronous>, transform_indices = @transform_7, window_bounds = array<i64: 64, 1>}, {pipeline_mode = #tpu.pipeline_mode<synchronous>, transform_indices = @transform_8, window_bounds = array<i64: 1, 1>}, {transform_indices = @transform_9, window_bounds = array<i64: 1, 256>}]} {
    %c0 = arith.constant 0 : index
    %c0_0 = arith.constant 0 : index
    %0 = vector.load %arg1[%c0, %c0_0] : memref<256x512xbf16, #tpu.memory_space<vmem>>, vector<256x512xbf16>
    %c0_1 = arith.constant 0 : index
    %c0_2 = arith.constant 0 : index
    %1 = vector.load %arg2[%c0_1, %c0_2] : memref<512x256xbf16, #tpu.memory_space<vmem>>, vector<512x256xbf16>
    %cst = arith.constant dense<0.000000e+00> : vector<256x256xf32>
    %2 = tpu.matmul %0, %1, %cst {dimension_numbers = #tpu.dot_dimension_numbers<[1], [0], [0], [1], [0, 0, 1, 1], [], []>} : vector<256x512xbf16>, vector<512x256xbf16>, vector<256x256xf32> -> vector<256x256xf32>
    %c0_3 = arith.constant 0 : index
    %c0_4 = arith.constant 0 : index
    %3 = vector.load %arg3[%c0_3, %c0_4] : memref<1x256xf32, #tpu.memory_space<vmem>>, vector<1x256xf32>
    %4 = vector.broadcast %3 : vector<1x256xf32> to vector<256x256xf32>
    %5 = arith.addf %2, %4 : vector<256x256xf32>
    %cst_5 = arith.constant 0.000000e+00 : f32
    %6 = vector.broadcast %cst_5 : f32 to vector<256x256xf32>
    %7 = arith.cmpf oge, %5, %6 : vector<256x256xf32>
    %cst_6 = arith.constant 2.000000e-01 : f32
    %8 = vector.broadcast %cst_6 : f32 to vector<256x256xf32>
    %9 = arith.mulf %8, %5 : vector<256x256xf32>
    %10 = arith.select %7, %5, %9 : vector<256x256xi1>, vector<256x256xf32>
    %11 = arith.truncf %10 : vector<256x256xf32> to vector<256x256xbf16>
    %c0_7 = arith.constant 0 : index
    %c0_8 = arith.constant 0 : index
    %12 = vector.load %arg4[%c0_7, %c0_8] : memref<256x128xbf16, #tpu.memory_space<vmem>>, vector<256x128xbf16>
    %cst_9 = arith.constant dense<0.000000e+00> : vector<256x128xf32>
    %13 = tpu.matmul %11, %12, %cst_9 {dimension_numbers = #tpu.dot_dimension_numbers<[1], [0], [0], [1], [0, 0, 1, 1], [], []>} : vector<256x256xbf16>, vector<256x128xbf16>, vector<256x128xf32> -> vector<256x128xf32>
    %c0_10 = arith.constant 0 : index
    %c0_11 = arith.constant 0 : index
    %14 = vector.load %arg5[%c0_10, %c0_11] : memref<1x128xf32, #tpu.memory_space<vmem>>, vector<1x128xf32>
    %15 = vector.broadcast %14 : vector<1x128xf32> to vector<256x128xf32>
    %16 = arith.addf %13, %15 : vector<256x128xf32>
    %cst_12 = arith.constant 0.000000e+00 : f32
    %17 = vector.broadcast %cst_12 : f32 to vector<256x128xf32>
    %18 = arith.cmpf oge, %16, %17 : vector<256x128xf32>
    %cst_13 = arith.constant 2.000000e-01 : f32
    %19 = vector.broadcast %cst_13 : f32 to vector<256x128xf32>
    %20 = arith.mulf %19, %16 : vector<256x128xf32>
    %21 = arith.select %18, %16, %20 : vector<256x128xi1>, vector<256x128xf32>
    %22 = tpu.transpose %21, [1, 0] : vector<256x128xf32> -> vector<128x256xf32>
    %23 = arith.truncf %22 : vector<128x256xf32> to vector<128x256xbf16>
    %c0_14 = arith.constant 0 : index
    %c0_15 = arith.constant 0 : index
    %24 = vector.load %arg6[%c0_14, %c0_15] : memref<64x128xbf16, #tpu.memory_space<vmem>>, vector<64x128xbf16>
    %cst_16 = arith.constant dense<0.000000e+00> : vector<64x256xf32>
    %25 = tpu.matmul %24, %23, %cst_16 {dimension_numbers = #tpu.dot_dimension_numbers<[1], [0], [0], [1], [0, 0, 1, 1], [], []>} : vector<64x128xbf16>, vector<128x256xbf16>, vector<64x256xf32> -> vector<64x256xf32>
    %c0_17 = arith.constant 0 : index
    %c0_18 = arith.constant 0 : index
    %26 = vector.load %arg7[%c0_17, %c0_18] : memref<64x1xf32, #tpu.memory_space<vmem>>, vector<64x1xf32>
    %27 = vector.broadcast %26 : vector<64x1xf32> to vector<64x256xf32>
    %28 = arith.addf %25, %27 : vector<64x256xf32>
    %cst_19 = arith.constant 0.000000e+00 : f32
    %29 = vector.broadcast %cst_19 : f32 to vector<64x256xf32>
    %30 = arith.cmpf oge, %28, %29 : vector<64x256xf32>
    %cst_20 = arith.constant 2.000000e-01 : f32
    %31 = vector.broadcast %cst_20 : f32 to vector<64x256xf32>
    %32 = arith.mulf %31, %28 : vector<64x256xf32>
    %33 = arith.select %30, %28, %32 : vector<64x256xi1>, vector<64x256xf32>
    %c0_21 = arith.constant 0 : index
    %c0_22 = arith.constant 0 : index
    %34 = vector.load %arg8[%c0_21, %c0_22] : memref<64x1xf32, #tpu.memory_space<vmem>>, vector<64x1xf32>
    %35 = vector.broadcast %34 : vector<64x1xf32> to vector<64x256xf32>
    %36 = arith.mulf %33, %35 : vector<64x256xf32>
    %cst_23 = arith.constant dense<0.000000e+00> : vector<256xf32>
    %37 = vector.multi_reduction <add>, %36, %cst_23 [0] : vector<64x256xf32> to vector<256xf32>
    %38 = vector.shape_cast %37 : vector<256xf32> to vector<1x256xf32>
    %c0_24 = arith.constant 0 : index
    %c0_25 = arith.constant 0 : index
    %39 = vector.load %arg9[%c0_24, %c0_25] : memref<1x1xf32, #tpu.memory_space<vmem>>, vector<1x1xf32>
    %40 = vector.broadcast %39 : vector<1x1xf32> to vector<1x256xf32>
    %41 = arith.addf %38, %40 : vector<1x256xf32>
    %42 = arith.negf %41 : vector<1x256xf32>
    %43 = math.exp %42 : vector<1x256xf32>
    %cst_26 = arith.constant 1.000000e+00 : f32
    %44 = vector.broadcast %cst_26 : f32 to vector<1x256xf32>
    %45 = arith.addf %44, %43 : vector<1x256xf32>
    %46 = arith.divf %44, %45 : vector<1x256xf32>
    %c0_27 = arith.constant 0 : index
    %c0_28 = arith.constant 0 : index
    %47 = vector.load %arg10[%c0_27, %c0_28] : memref<1x256xf32, #tpu.memory_space<vmem>>, vector<1x256xf32>
    tpu.vector_store %arg10[%c0_27, %c0_28], %46 {strides = array<i32>} : memref<1x256xf32, #tpu.memory_space<vmem>>, vector<1x256xf32>,
    return
  }
  func.func @transform_0(%arg0: i32) -> (i32, i32) {
    %c0_i32 = arith.constant 0 : i32
    %c0_i32_0 = arith.constant 0 : i32
    return %arg0, %c0_i32 : i32, i32
  }
  func.func @transform_1(%arg0: i32) -> (i32, i32) {
    %c0_i32 = arith.constant 0 : i32
    %c0_i32_0 = arith.constant 0 : i32
    %c0_i32_1 = arith.constant 0 : i32
    return %c0_i32, %c0_i32_0 : i32, i32
  }
  func.func @transform_2(%arg0: i32) -> (i32, i32) {
    %c0_i32 = arith.constant 0 : i32
    %c0_i32_0 = arith.constant 0 : i32
    %c0_i32_1 = arith.constant 0 : i32
    return %c0_i32, %c0_i32_0 : i32, i32
  }
  func.func @transform_3(%arg0: i32) -> (i32, i32) {
    %c0_i32 = arith.constant 0 : i32
    %c0_i32_0 = arith.constant 0 : i32
    %c0_i32_1 = arith.constant 0 : i32
    return %c0_i32, %c0_i32_0 : i32, i32
  }
  func.func @transform_4(%arg0: i32) -> (i32, i32) {
    %c0_i32 = arith.constant 0 : i32
    %c0_i32_0 = arith.constant 0 : i32
    %c0_i32_1 = arith.constant 0 : i32
    return %c0_i32, %c0_i32_0 : i32, i32
  }
  func.func @transform_5(%arg0: i32) -> (i32, i32) {
    %c0_i32 = arith.constant 0 : i32
    %c0_i32_0 = arith.constant 0 : i32
    %c0_i32_1 = arith.constant 0 : i32
    return %c0_i32, %c0_i32_0 : i32, i32
  }
  func.func @transform_6(%arg0: i32) -> (i32, i32) {
    %c0_i32 = arith.constant 0 : i32
    %c0_i32_0 = arith.constant 0 : i32
    %c0_i32_1 = arith.constant 0 : i32
    return %c0_i32, %c0_i32_0 : i32, i32
  }
  func.func @transform_7(%arg0: i32) -> (i32, i32) {
    %c0_i32 = arith.constant 0 : i32
    %c0_i32_0 = arith.constant 0 : i32
    %c0_i32_1 = arith.constant 0 : i32
    return %c0_i32, %c0_i32_0 : i32, i32
  }
  func.func @transform_8(%arg0: i32) -> (i32, i32) {
    %c0_i32 = arith.constant 0 : i32
    %c0_i32_0 = arith.constant 0 : i32
    %c0_i32_1 = arith.constant 0 : i32
    return %c0_i32, %c0_i32_0 : i32, i32
  }
  func.func @transform_9(%arg0: i32) -> (i32, i32) {
    %c0_i32 = arith.constant 0 : i32
    %c0_i32_0 = arith.constant 0 : i32
    return %c0_i32, %arg0 : i32, i32
  }
}

</mosaic_0001>

<llo_original>
// kernel: discriminator_forward.1
$region0: #{discriminator_forward.1}
  #allocation0 [shape = 'u32[]', space=smem, size = 0x4, offset = 0x4, fixed_abs, tag = 'smem constant byte address 0x4 - core index']
  #allocation1 [shape = 'u32[144,128]{1,0:T(1,128)}', space=vmem, size = 0x12000, scoped, tag = 'internal scratch']
  #allocation2 [shape = 'f32[1,1]{1,0:T(1,128)S(1)}', space=vmem, size = 0x200, scoped, tag = 'scoped memory for discriminator_forward.1']
  %s0 = inlined_call_operand.vmem [shape: bf16[512,512], index: 0, kind: input, shape index: {}]
  %s1 = inlined_call_operand.vmem [shape: bf16[512,256], index: 1, kind: input, shape index: {}]
  %s2 = inlined_call_operand.vmem [shape: f32[1,256], index: 2, kind: input, shape index: {}]
  %s3 = inlined_call_operand.vmem [shape: bf16[256,128], index: 3, kind: input, shape index: {}]
  %s4 = inlined_call_operand.vmem [shape: f32[1,128], index: 4, kind: input, shape index: {}]
  %s5 = inlined_call_operand.vmem [shape: bf16[64,128], index: 5, kind: input, shape index: {}]
  %s6 = inlined_call_operand.vmem [shape: f32[64,1], index: 6, kind: input, shape index: {}]
  %s7 = inlined_call_operand.vmem [shape: f32[64,1], index: 7, kind: input, shape index: {}]
  %s8 = inlined_call_operand.<no memory space> [shape: f32[1,1], index: 8, kind: input, shape index: {}]
  %s9 = inlined_call_operand.vmem [shape: f32[1,512], index: 9, kind: output, shape index: {}]
  %s10 = sld [smem:[#allocation0]]
  $region69: #{discriminator_forward.1} parent=0
    _
  %s12 = ssub.s32 1, %s10
  %s13 = scalar_select 0, %s12, %s10
  %v14 = vstv %s8
  %15 = vst [vmem:[#allocation2] sm:$0x1] %v14
  loop: start=0, step=1, limit=4
  $region2: #{discriminator_forward.1} parent=0 // loop_pre_header
    _
  $region3: #{discriminator_forward.1} parent=0 // loop_header
    %s17 = sphi 0, %s21
    %p18 = scmp.ge.s32.totalorder %s17, 4
    %s27 = sphi 0, %s29
    %s30 = sphi 0, %s27
    %s31 = sphi 0, %s30
    %s47 = sphi 0, %s31
    %s51 = sphi 0, %s51
    %s53 = sphi 0, %s51
    %s54 = sphi 0, %s53
    %s68 = sphi 0, %s54
    %s72 = sphi 0, %s72
    %s74 = sphi 0, %s72
    %s75 = sphi 0, %s74
    %s89 = sphi 0, %s75
    %s93 = sphi 0, %s93
    %s95 = sphi 0, %s93
    %s96 = sphi 0, %s95
    %s110 = sphi 0, %s96
    %s114 = sphi 0, %s114
    %s116 = sphi 0, %s114
    %s117 = sphi 0, %s116
    %s131 = sphi 0, %s117
    %s135 = sphi 0, %s135
    %s137 = sphi 0, %s135
    %s138 = sphi 0, %s137
    %s152 = sphi 0, %s138
    %s156 = sphi 0, %s156
    %s158 = sphi 0, %s156
    %s159 = sphi 0, %s158
    %s173 = sphi 0, %s159
    %s177 = sphi 0, %s177
    %s179 = sphi 0, %s177
    %s180 = sphi 0, %s179
    %s194 = sphi 0, %s180
    %s198 = sphi 0, %s198
    %s200 = sphi 0, %s198
    %s201 = sphi 0, %s200
    %s215 = sphi 0, %s201
    %s221 = sphi 0, %s223
    %s224 = sphi 0, %s221
    %s225 = sphi 0, %s224
    %s241 = sphi 0, %s225
  $region4: #{discriminator_forward.1} parent=0 // loop_header_branch
    %20 = sbr.rel (%p18) target = $region8
  $region5: #{discriminator_forward.1} parent=0 // loop_body
    %s22 = ssub.s32 %s17, 1
    %s23 = ssub.s32 %s17, 2
    %s24 = sadd.s32 %s17, 1
    %s25 = ssub.s32 %s17, %s24
    %p26 = scmp.eq.s32.totalorder %s25, 0
    %s28 = sadd.s32 %s27, 1
    %s29 = scalar_select %p26, %s27, %s28
    %p32 = pneg %p26
    %p33 = scmp.eq.s32.totalorder %s17, 1
    %p34 = por %p32, %p33
    %p35 = scmp.ne.s32.totalorder %s27, %s30
    %p36 = scmp.eq.s32.totalorder %s17, 0
    %p37 = por %p35, %p36
    %p38 = scmp.ne.s32.totalorder %s27, %s30
    %p39 = scmp.eq.s32.totalorder %s22, 1
    %p40 = por %p38, %p39
    %p41 = scmp.ne.s32.totalorder %s30, %s31
    %p42 = scmp.eq.s32.totalorder %s22, 0
    %p43 = por %p41, %p42
    %p44 = scmp.ne.s32.totalorder %s30, %s31
    %p45 = scmp.eq.s32.totalorder %s23, 1
    %p46 = por %p44, %p45
    %p48 = scmp.ne.s32.totalorder %s31, %s47
    %p49 = scmp.eq.s32.totalorder %s23, 0
    %p50 = por %p48, %p49
    %s52 = sadd.s32 %s51, 1
    %p55 = scmp.eq.s32.totalorder %s17, 1
    %p56 = scmp.ne.s32.totalorder %s51, %s53
    %p57 = scmp.eq.s32.totalorder %s17, 0
    %p58 = por %p56, %p57
    %p59 = scmp.ne.s32.totalorder %s51, %s53
    %p60 = scmp.eq.s32.totalorder %s22, 1
    %p61 = por %p59, %p60
    %p62 = scmp.ne.s32.totalorder %s53, %s54
    %p63 = scmp.eq.s32.totalorder %s22, 0
    %p64 = por %p62, %p63
    %p65 = scmp.ne.s32.totalorder %s53, %s54
    %p66 = scmp.eq.s32.totalorder %s23, 1
    %p67 = por %p65, %p66
    %p69 = scmp.ne.s32.totalorder %s54, %s68
    %p70 = scmp.eq.s32.totalorder %s23, 0
    %p71 = por %p69, %p70
    %s73 = sadd.s32 %s72, 1
    %p76 = scmp.eq.s32.totalorder %s17, 1
    %p77 = scmp.ne.s32.totalorder %s72, %s74
    %p78 = scmp.eq.s32.totalorder %s17, 0
    %p79 = por %p77, %p78
    %p80 = scmp.ne.s32.totalorder %s72, %s74
    %p81 = scmp.eq.s32.totalorder %s22, 1
    %p82 = por %p80, %p81
    %p83 = scmp.ne.s32.totalorder %s74, %s75
    %p84 = scmp.eq.s32.totalorder %s22, 0
    %p85 = por %p83, %p84
    %p86 = scmp.ne.s32.totalorder %s74, %s75
    %p87 = scmp.eq.s32.totalorder %s23, 1
    %p88 = por %p86, %p87
    %p90 = scmp.ne.s32.totalorder %s75, %s89
    %p91 = scmp.eq.s32.totalorder %s23, 0
    %p92 = por %p90, %p91
    %s94 = sadd.s32 %s93, 1
    %p97 = scmp.eq.s32.totalorder %s17, 1
    %p98 = scmp.ne.s32.totalorder %s93, %s95
    %p99 = scmp.eq.s32.totalorder %s17, 0
    %p100 = por %p98, %p99
    %p101 = scmp.ne.s32.totalorder %s93, %s95
    %p102 = scmp.eq.s32.totalorder %s22, 1
    %p103 = por %p101, %p102
    %p104 = scmp.ne.s32.totalorder %s95, %s96
    %p105 = scmp.eq.s32.totalorder %s22, 0
    %p106 = por %p104, %p105
    %p107 = scmp.ne.s32.totalorder %s95, %s96
    %p108 = scmp.eq.s32.totalorder %s23, 1
    %p109 = por %p107, %p108
    %p111 = scmp.ne.s32.totalorder %s96, %s110
    %p112 = scmp.eq.s32.totalorder %s23, 0
    %p113 = por %p111, %p112
    %s115 = sadd.s32 %s114, 1
    %p118 = scmp.eq.s32.totalorder %s17, 1
    %p119 = scmp.ne.s32.totalorder %s114, %s116
    %p120 = scmp.eq.s32.totalorder %s17, 0
    %p121 = por %p119, %p120
    %p122 = scmp.ne.s32.totalorder %s114, %s116
    %p123 = scmp.eq.s32.totalorder %s22, 1
    %p124 = por %p122, %p123
    %p125 = scmp.ne.s32.totalorder %s116, %s117
    %p126 = scmp.eq.s32.totalorder %s22, 0
    %p127 = por %p125, %p126
    %p128 = scmp.ne.s32.totalorder %s116, %s117
    %p129 = scmp.eq.s32.totalorder %s23, 1
    %p130 = por %p128, %p129
    %p132 = scmp.ne.s32.totalorder %s117, %s131
    %p133 = scmp.eq.s32.totalorder %s23, 0
    %p134 = por %p132, %p133
    %s136 = sadd.s32 %s135, 1
    %p139 = scmp.eq.s32.totalorder %s17, 1
    %p140 = scmp.ne.s32.totalorder %s135, %s137
    %p141 = scmp.eq.s32.totalorder %s17, 0
    %p142 = por %p140, %p141
    %p143 = scmp.ne.s32.totalorder %s135, %s137
    %p144 = scmp.eq.s32.totalorder %s22, 1
    %p145 = por %p143, %p144
    %p146 = scmp.ne.s32.totalorder %s137, %s138
    %p147 = scmp.eq.s32.totalorder %s22, 0
    %p148 = por %p146, %p147
    %p149 = scmp.ne.s32.totalorder %s137, %s138
    %p150 = scmp.eq.s32.totalorder %s23, 1
    %p151 = por %p149, %p150
    %p153 = scmp.ne.s32.totalorder %s138, %s152
    %p154 = scmp.eq.s32.totalorder %s23, 0
    %p155 = por %p153, %p154
    %s157 = sadd.s32 %s156, 1
    %p160 = scmp.eq.s32.totalorder %s17, 1
    %p161 = scmp.ne.s32.totalorder %s156, %s158
    %p162 = scmp.eq.s32.totalorder %s17, 0
    %p163 = por %p161, %p162
    %p164 = scmp.ne.s32.totalorder %s156, %s158
    %p165 = scmp.eq.s32.totalorder %s22, 1
    %p166 = por %p164, %p165
    %p167 = scmp.ne.s32.totalorder %s158, %s159
    %p168 = scmp.eq.s32.totalorder %s22, 0
    %p169 = por %p167, %p168
    %p170 = scmp.ne.s32.totalorder %s158, %s159
    %p171 = scmp.eq.s32.totalorder %s23, 1
    %p172 = por %p170, %p171
    %p174 = scmp.ne.s32.totalorder %s159, %s173
    %p175 = scmp.eq.s32.totalorder %s23, 0
    %p176 = por %p174, %p175
    %s178 = sadd.s32 %s177, 1
    %p181 = scmp.eq.s32.totalorder %s17, 1
    %p182 = scmp.ne.s32.totalorder %s177, %s179
    %p183 = scmp.eq.s32.totalorder %s17, 0
    %p184 = por %p182, %p183
    %p185 = scmp.ne.s32.totalorder %s177, %s179
    %p186 = scmp.eq.s32.totalorder %s22, 1
    %p187 = por %p185, %p186
    %p188 = scmp.ne.s32.totalorder %s179, %s180
    %p189 = scmp.eq.s32.totalorder %s22, 0
    %p190 = por %p188, %p189
    %p191 = scmp.ne.s32.totalorder %s179, %s180
    %p192 = scmp.eq.s32.totalorder %s23, 1
    %p193 = por %p191, %p192
    %p195 = scmp.ne.s32.totalorder %s180, %s194
    %p196 = scmp.eq.s32.totalorder %s23, 0
    %p197 = por %p195, %p196
    %s199 = sadd.s32 %s198, 1
    %p202 = scmp.eq.s32.totalorder %s17, 1
    %p203 = scmp.ne.s32.totalorder %s198, %s200
    %p204 = scmp.eq.s32.totalorder %s17, 0
    %p205 = por %p203, %p204
    %p206 = scmp.ne.s32.totalorder %s198, %s200
    %p207 = scmp.eq.s32.totalorder %s22, 1
    %p208 = por %p206, %p207
    %p209 = scmp.ne.s32.totalorder %s200, %s201
    %p210 = scmp.eq.s32.totalorder %s22, 0
    %p211 = por %p209, %p210
    %p212 = scmp.ne.s32.totalorder %s200, %s201
    %p213 = scmp.eq.s32.totalorder %s23, 1
    %p214 = por %p212, %p213
    %p216 = scmp.ne.s32.totalorder %s201, %s215
    %p217 = scmp.eq.s32.totalorder %s23, 0
    %p218 = por %p216, %p217
    %s219 = ssub.s32 %s17, %s24
    %p220 = scmp.eq.s32.totalorder %s219, 0
    %s222 = sadd.s32 %s221, 1
    %s223 = scalar_select %p220, %s221, %s222
    %p226 = pneg %p220
    %p227 = scmp.eq.s32.totalorder %s17, 1
    %p228 = por %p226, %p227
    %p229 = scmp.ne.s32.totalorder %s221, %s224
    %p230 = scmp.eq.s32.totalorder %s17, 0
    %p231 = por %p229, %p230
    %p232 = scmp.ne.s32.totalorder %s221, %s224
    %p233 = scmp.eq.s32.totalorder %s22, 1
    %p234 = por %p232, %p233
    %p235 = scmp.ne.s32.totalorder %s224, %s225
    %p236 = scmp.eq.s32.totalorder %s22, 0
    %p237 = por %p235, %p236
    %p238 = scmp.ne.s32.totalorder %s224, %s225
    %p239 = scmp.eq.s32.totalorder %s23, 1
    %p240 = por %p238, %p239
    %p242 = scmp.ne.s32.totalorder %s225, %s241
    %p243 = scmp.eq.s32.totalorder %s23, 0
    %p244 = por %p242, %p243
    %p245 = scmp.le.s32.totalorder 1, %s17
    %p246 = scmp.lt.s32.totalorder %s17, 3
    %p247 = pnand %p245, %p246
    %p248 = pneg %p247
    // Predicated region
    $region9: #{discriminator_forward.1} parent=5 // pred_check
      _
    $region10: #{discriminator_forward.1} parent=5 // pred_check_branch
      %250 = sbr.rel (%p247) target = $region12
    $region11: #{discriminator_forward.1} parent=5 // pred_region
      %s251 = ssub.s32 %s17, 1
      // Predicated region
      $region13: #{discriminator_forward.1} parent=11 // pred_check
        %p252 = pneg %p64
      $region14: #{discriminator_forward.1} parent=11 // pred_check_branch
        %254 = sbr.rel (%p252) target = $region16
      $region15: #{discriminator_forward.1} parent=11 // pred_region
        _
      $region16: #{discriminator_forward.1} parent=11 // pred_fallthru
        _
      // Predicated region
      $region17: #{discriminator_forward.1} parent=11 // pred_check
        %p255 = pneg %p85
      $region18: #{discriminator_forward.1} parent=11 // pred_check_branch
        %257 = sbr.rel (%p255) target = $region20
      $region19: #{discriminator_forward.1} parent=11 // pred_region
        _
      $region20: #{discriminator_forward.1} parent=11 // pred_fallthru
        _
      // Predicated region
      $region21: #{discriminator_forward.1} parent=11 // pred_check
        %p258 = pneg %p106
      $region22: #{discriminator_forward.1} parent=11 // pred_check_branch
        %260 = sbr.rel (%p258) target = $region24
      $region23: #{discriminator_forward.1} parent=11 // pred_region
        _
      $region24: #{discriminator_forward.1} parent=11 // pred_fallthru
        _
      // Predicated region
      $region25: #{discriminator_forward.1} parent=11 // pred_check
        %p261 = pneg %p127
      $region26: #{discriminator_forward.1} parent=11 // pred_check_branch
        %263 = sbr.rel (%p261) target = $region28
      $region27: #{discriminator_forward.1} parent=11 // pred_region
        _
      $region28: #{discriminator_forward.1} parent=11 // pred_fallthru
        _
      // Predicated region
      $region29: #{discriminator_forward.1} parent=11 // pred_check
        %p264 = pneg %p148
      $region30: #{discriminator_forward.1} parent=11 // pred_check_branch
        %266 = sbr.rel (%p264) target = $region32
      $region31: #{discriminator_forward.1} parent=11 // pred_region
        _
      $region32: #{discriminator_forward.1} parent=11 // pred_fallthru
        _
      // Predicated region
      $region33: #{discriminator_forward.1} parent=11 // pred_check
        %p267 = pneg %p169
      $region34: #{discriminator_forward.1} parent=11 // pred_check_branch
        %269 = sbr.rel (%p267) target = $region36
      $region35: #{discriminator_forward.1} parent=11 // pred_region
        _
      $region36: #{discriminator_forward.1} parent=11 // pred_fallthru
        _
      // Predicated region
      $region37: #{discriminator_forward.1} parent=11 // pred_check
        %p270 = pneg %p190
      $region38: #{discriminator_forward.1} parent=11 // pred_check_branch
        %272 = sbr.rel (%p270) target = $region40
      $region39: #{discriminator_forward.1} parent=11 // pred_region
        _
      $region40: #{discriminator_forward.1} parent=11 // pred_fallthru
        _
      // Predicated region
      $region41: #{discriminator_forward.1} parent=11 // pred_check
        %p273 = pneg %p211
      $region42: #{discriminator_forward.1} parent=11 // pred_check_branch
        %275 = sbr.rel (%p273) target = $region44
      $region43: #{discriminator_forward.1} parent=11 // pred_region
        _
      $region44: #{discriminator_forward.1} parent=11 // pred_fallthru
        _
    $region12: #{discriminator_forward.1} parent=5 // pred_fallthru
      _
    %p276 = scmp.lt.s32.totalorder %s17, 2
    // Predicated region
    $region45: #{discriminator_forward.1} parent=5 // pred_check
      %p277 = pneg %p276
    $region46: #{discriminator_forward.1} parent=5 // pred_check_branch
      %279 = sbr.rel (%p277) target = $region48
    $region47: #{discriminator_forward.1} parent=5 // pred_region
      // Predicated region
      $region49: #{discriminator_forward.1} parent=47 // pred_check
        %p280 = pneg %p37
      $region50: #{discriminator_forward.1} parent=47 // pred_check_branch
        %282 = sbr.rel (%p280) target = $region52
      $region51: #{discriminator_forward.1} parent=47 // pred_region
        %s283 = smul.u32 32, %s17
        %p284 = scmp.lt.s32.totalorder %s283, 63
        %s285 = scalar_select %p284, %s283, 63
        %s286 = smul.addr %s285, 4
        %s287 = smul.addr %s286, 4
        %s288 = scalar_lea.vmem %s0, %s287
        %s289 = smul.u32 32, %s17
      $region52: #{discriminator_forward.1} parent=47 // pred_fallthru
        _
    $region48: #{discriminator_forward.1} parent=5 // pred_fallthru
      _
    %p290 = scmp.le.s32.totalorder 1, %s17
    %p291 = scmp.lt.s32.totalorder %s17, 3
    %p292 = pnand %p290, %p291
    %p293 = pneg %p292
    // Predicated region
    $region53: #{discriminator_forward.1} parent=5 // pred_check
      _
    $region54: #{discriminator_forward.1} parent=5 // pred_check_branch
      %295 = sbr.rel (%p292) target = $region56
    $region55: #{discriminator_forward.1} parent=5 // pred_region
      %s296 = ssub.s32 %s17, 1
      %s297 = smul.u32 32, %s22
      %p298 = scmp.lt.s32.totalorder %s297, 63
      %s299 = scalar_select %p298, %s297, 63
      %s300 = smul.addr %s299, 4
      %s301 = smul.addr %s300, 4
      %s302 = scalar_lea.vmem %s0, %s301
      %p303 = pneg %p43
      %p304 = pneg %p40
      %p305 = pneg %p64
      %p306 = pneg %p61
      %p307 = pneg %p85
      %p308 = pneg %p82
      %p309 = pneg %p106
      %p310 = pneg %p103
      %p311 = pneg %p127
      %p312 = pneg %p124
      %p313 = pneg %p148
      %p314 = pneg %p145
      %p315 = pneg %p169
      %p316 = pneg %p166
      %p317 = pneg %p190
      %p318 = pneg %p187
      %p319 = pneg %p211
      %p320 = pneg %p208
      %p321 = pneg %p237
      %p322 = pneg %p234
      %s323 = smul.u32 2, %s22
      %p324 = scmp.lt.s32.totalorder %s323, 3
      %s325 = scalar_select %p324, %s323, 3
      %s326 = scalar_lea.vmem %s9, %s325
      %s327 = smul.u32 32, %s22
      %p328 = scmp.lt.s32.totalorder %s327, 63
      %s329 = scalar_select %p328, %s327, 63
      %s330 = smul.addr %s329, 4
      %s331 = smul.addr %s330, 4
      %s332 = scalar_lea.vmem %s0, %s331
      %s333 = smul.u32 32, %s22
      %s334 = smul.u32 2, %s22
      %p335 = scmp.lt.s32.totalorder %s334, 3
      %s336 = scalar_select %p335, %s334, 3
      %s337 = scalar_lea.vmem %s9, %s336
      %s338 = smul.u32 2, %s22
      %v340 = vld [vmem:[%s332] sm:$0xff]
      %v341 = vld [vmem:[%s332 + $0x8] sm:$0xff]
      %v342 = vld [vmem:[%s332 + $0x10] sm:$0xff]
      %v343 = vld [vmem:[%s332 + $0x18] sm:$0xff]
      %v344 = vld [vmem:[%s332 + $0x20] sm:$0xff]
      %v345 = vld [vmem:[%s332 + $0x28] sm:$0xff]
      %v346 = vld [vmem:[%s332 + $0x30] sm:$0xff]
      %v347 = vld [vmem:[%s332 + $0x38] sm:$0xff]
      %v348 = vld [vmem:[%s332 + $0x40] sm:$0xff]
      %v349 = vld [vmem:[%s332 + $0x48] sm:$0xff]
      %v350 = vld [vmem:[%s332 + $0x50] sm:$0xff]
      %v351 = vld [vmem:[%s332 + $0x58] sm:$0xff]
      %v352 = vld [vmem:[%s332 + $0x60] sm:$0xff]
      %v353 = vld [vmem:[%s332 + $0x68] sm:$0xff]
      %v354 = vld [vmem:[%s332 + $0x70] sm:$0xff]
      %v355 = vld [vmem:[%s332 + $0x78] sm:$0xff]
      %v356 = vld [vmem:[%s332 + $0x80] sm:$0xff]
      %v357 = vld [vmem:[%s332 + $0x88] sm:$0xff]
      %v358 = vld [vmem:[%s332 + $0x90] sm:$0xff]
      %v359 = vld [vmem:[%s332 + $0x98] sm:$0xff]
      %v360 = vld [vmem:[%s332 + $0xa0] sm:$0xff]
      %v361 = vld [vmem:[%s332 + $0xa8] sm:$0xff]
      %v362 = vld [vmem:[%s332 + $0xb0] sm:$0xff]
      %v363 = vld [vmem:[%s332 + $0xb8] sm:$0xff]
      %v364 = vld [vmem:[%s332 + $0xc0] sm:$0xff]
      %v365 = vld [vmem:[%s332 + $0xc8] sm:$0xff]
      %v366 = vld [vmem:[%s332 + $0xd0] sm:$0xff]
      %v367 = vld [vmem:[%s332 + $0xd8] sm:$0xff]
      %v368 = vld [vmem:[%s332 + $0xe0] sm:$0xff]
      %v369 = vld [vmem:[%s332 + $0xe8] sm:$0xff]
      %v370 = vld [vmem:[%s332 + $0xf0] sm:$0xff]
      %v371 = vld [vmem:[%s332 + $0xf8] sm:$0xff]
      %v372 = vld [vmem:[%s332 + $0x100] sm:$0xff]
      %v373 = vld [vmem:[%s332 + $0x108] sm:$0xff]
      %v374 = vld [vmem:[%s332 + $0x110] sm:$0xff]
      %v375 = vld [vmem:[%s332 + $0x118] sm:$0xff]
      %v376 = vld [vmem:[%s332 + $0x120] sm:$0xff]
      %v377 = vld [vmem:[%s332 + $0x128] sm:$0xff]
      %v378 = vld [vmem:[%s332 + $0x130] sm:$0xff]
      %v379 = vld [vmem:[%s332 + $0x138] sm:$0xff]
      %v380 = vld [vmem:[%s332 + $0x140] sm:$0xff]
      %v381 = vld [vmem:[%s332 + $0x148] sm:$0xff]
      %v382 = vld [vmem:[%s332 + $0x150] sm:$0xff]
      %v383 = vld [vmem:[%s332 + $0x158] sm:$0xff]
      %v384 = vld [vmem:[%s332 + $0x160] sm:$0xff]
      %v385 = vld [vmem:[%s332 + $0x168] sm:$0xff]
      %v386 = vld [vmem:[%s332 + $0x170] sm:$0xff]
      %v387 = vld [vmem:[%s332 + $0x178] sm:$0xff]
      %v388 = vld [vmem:[%s332 + $0x180] sm:$0xff]
      %v389 = vld [vmem:[%s332 + $0x188] sm:$0xff]
      %v390 = vld [vmem:[%s332 + $0x190] sm:$0xff]
      %v391 = vld [vmem:[%s332 + $0x198] sm:$0xff]
      %v392 = vld [vmem:[%s332 + $0x1a0] sm:$0xff]
      %v393 = vld [vmem:[%s332 + $0x1a8] sm:$0xff]
      %v394 = vld [vmem:[%s332 + $0x1b0] sm:$0xff]
      %v395 = vld [vmem:[%s332 + $0x1b8] sm:$0xff]
      %v396 = vld [vmem:[%s332 + $0x1c0] sm:$0xff]
      %v397 = vld [vmem:[%s332 + $0x1c8] sm:$0xff]
      %v398 = vld [vmem:[%s332 + $0x1d0] sm:$0xff]
      %v399 = vld [vmem:[%s332 + $0x1d8] sm:$0xff]
      %v400 = vld [vmem:[%s332 + $0x1e0] sm:$0xff]
      %v401 = vld [vmem:[%s332 + $0x1e8] sm:$0xff]
      %v402 = vld [vmem:[%s332 + $0x1f0] sm:$0xff]
      %v403 = vld [vmem:[%s332 + $0x1f8] sm:$0xff]
      %v404 = vld [vmem:[%s1] sm:$0xff]
      %v405 = vld [vmem:[%s1 + $0x8] sm:$0xff]
      %v406 = vld [vmem:[%s1 + $0x10] sm:$0xff]
      %v407 = vld [vmem:[%s1 + $0x18] sm:$0xff]
      %v408 = vld [vmem:[%s1 + $0x20] sm:$0xff]
      %v409 = vld [vmem:[%s1 + $0x28] sm:$0xff]
      %v410 = vld [vmem:[%s1 + $0x30] sm:$0xff]
      %v411 = vld [vmem:[%s1 + $0x38] sm:$0xff]
      %v412 = vld [vmem:[%s1 + $0x40] sm:$0xff]
      %v413 = vld [vmem:[%s1 + $0x48] sm:$0xff]
      %v414 = vld [vmem:[%s1 + $0x50] sm:$0xff]
      %v415 = vld [vmem:[%s1 + $0x58] sm:$0xff]
      %v416 = vld [vmem:[%s1 + $0x60] sm:$0xff]
      %v417 = vld [vmem:[%s1 + $0x68] sm:$0xff]
      %v418 = vld [vmem:[%s1 + $0x70] sm:$0xff]
      %v419 = vld [vmem:[%s1 + $0x78] sm:$0xff]
      %v420 = vld [vmem:[%s1 + $0x80] sm:$0xff]
      %v421 = vld [vmem:[%s1 + $0x88] sm:$0xff]
      %v422 = vld [vmem:[%s1 + $0x90] sm:$0xff]
      %v423 = vld [vmem:[%s1 + $0x98] sm:$0xff]
      %v424 = vld [vmem:[%s1 + $0xa0] sm:$0xff]
      %v425 = vld [vmem:[%s1 + $0xa8] sm:$0xff]
      %v426 = vld [vmem:[%s1 + $0xb0] sm:$0xff]
      %v427 = vld [vmem:[%s1 + $0xb8] sm:$0xff]
      %v428 = vld [vmem:[%s1 + $0xc0] sm:$0xff]
      %v429 = vld [vmem:[%s1 + $0xc8] sm:$0xff]
      %v430 = vld [vmem:[%s1 + $0xd0] sm:$0xff]
      %v431 = vld [vmem:[%s1 + $0xd8] sm:$0xff]
      %v432 = vld [vmem:[%s1 + $0xe0] sm:$0xff]
      %v433 = vld [vmem:[%s1 + $0xe8] sm:$0xff]
      %v434 = vld [vmem:[%s1 + $0xf0] sm:$0xff]
      %v435 = vld [vmem:[%s1 + $0xf8] sm:$0xff]
      %v436 = vld [vmem:[%s1 + $0x100] sm:$0xff]
      %v437 = vld [vmem:[%s1 + $0x108] sm:$0xff]
      %v438 = vld [vmem:[%s1 + $0x110] sm:$0xff]
      %v439 = vld [vmem:[%s1 + $0x118] sm:$0xff]
      %v440 = vld [vmem:[%s1 + $0x120] sm:$0xff]
      %v441 = vld [vmem:[%s1 + $0x128] sm:$0xff]
      %v442 = vld [vmem:[%s1 + $0x130] sm:$0xff]
      %v443 = vld [vmem:[%s1 + $0x138] sm:$0xff]
      %v444 = vld [vmem:[%s1 + $0x140] sm:$0xff]
      %v445 = vld [vmem:[%s1 + $0x148] sm:$0xff]
      %v446 = vld [vmem:[%s1 + $0x150] sm:$0xff]
      %v447 = vld [vmem:[%s1 + $0x158] sm:$0xff]
      %v448 = vld [vmem:[%s1 + $0x160] sm:$0xff]
      %v449 = vld [vmem:[%s1 + $0x168] sm:$0xff]
      %v450 = vld [vmem:[%s1 + $0x170] sm:$0xff]
      %v451 = vld [vmem:[%s1 + $0x178] sm:$0xff]
      %v452 = vld [vmem:[%s1 + $0x180] sm:$0xff]
      %v453 = vld [vmem:[%s1 + $0x188] sm:$0xff]
      %v454 = vld [vmem:[%s1 + $0x190] sm:$0xff]
      %v455 = vld [vmem:[%s1 + $0x198] sm:$0xff]
      %v456 = vld [vmem:[%s1 + $0x1a0] sm:$0xff]
      %v457 = vld [vmem:[%s1 + $0x1a8] sm:$0xff]
      %v458 = vld [vmem:[%s1 + $0x1b0] sm:$0xff]
      %v459 = vld [vmem:[%s1 + $0x1b8] sm:$0xff]
      %v460 = vld [vmem:[%s1 + $0x1c0] sm:$0xff]
      %v461 = vld [vmem:[%s1 + $0x1c8] sm:$0xff]
      %v462 = vld [vmem:[%s1 + $0x1d0] sm:$0xff]
      %v463 = vld [vmem:[%s1 + $0x1d8] sm:$0xff]
      %v464 = vld [vmem:[%s1 + $0x1e0] sm:$0xff]
      %v465 = vld [vmem:[%s1 + $0x1e8] sm:$0xff]
      %v466 = vld [vmem:[%s1 + $0x1f0] sm:$0xff]
      %v467 = vld [vmem:[%s1 + $0x1f8] sm:$0xff]
      %v468 = vld [vmem:[%s2] sm:$0x3]
      %v470 = vlaneseq
      %v471 = vshrl.u32 %v470, 7
      %v472 = vsub.s32 0, %v471
      %v473 = vrot.slane %v468, %v472
      %v474 = vlaneseq
      %v475 = vshrl.u32 %v474, 7
      %v476 = vsub.s32 1, %v475
      %v477 = vrot.slane %v468, %v476
      %v544 = vunpack.c.l.b16 %v340
      %v545 = vunpack.c.h.b16 %v340
      %v546 = vunpack.c.l.b16 %v341
      %v547 = vunpack.c.h.b16 %v341
      %v548 = vunpack.c.l.b16 %v342
      %v549 = vunpack.c.h.b16 %v342
      %v550 = vunpack.c.l.b16 %v343
      %v551 = vunpack.c.h.b16 %v343
      %v552 = vunpack.c.l.b16 %v344
      %v553 = vunpack.c.h.b16 %v344
      %v554 = vunpack.c.l.b16 %v345
      %v555 = vunpack.c.h.b16 %v345
      %v556 = vunpack.c.l.b16 %v346
      %v557 = vunpack.c.h.b16 %v346
      %v558 = vunpack.c.l.b16 %v347
      %v559 = vunpack.c.h.b16 %v347
      %v560 = vunpack.c.l.b16 %v348
      %v561 = vunpack.c.h.b16 %v348
      %v562 = vunpack.c.l.b16 %v349
      %v563 = vunpack.c.h.b16 %v349
      %v564 = vunpack.c.l.b16 %v350
      %v565 = vunpack.c.h.b16 %v350
      %v566 = vunpack.c.l.b16 %v351
      %v567 = vunpack.c.h.b16 %v351
      %v568 = vunpack.c.l.b16 %v352
      %v569 = vunpack.c.h.b16 %v352
      %v570 = vunpack.c.l.b16 %v353
      %v571 = vunpack.c.h.b16 %v353
      %v572 = vunpack.c.l.b16 %v354
      %v573 = vunpack.c.h.b16 %v354
      %v574 = vunpack.c.l.b16 %v355
      %v575 = vunpack.c.h.b16 %v355
      %v576 = vunpack.c.l.b16 %v356
      %v577 = vunpack.c.h.b16 %v356
      %v578 = vunpack.c.l.b16 %v357
      %v579 = vunpack.c.h.b16 %v357
      %v580 = vunpack.c.l.b16 %v358
      %v581 = vunpack.c.h.b16 %v358
      %v582 = vunpack.c.l.b16 %v359
      %v583 = vunpack.c.h.b16 %v359
      %v584 = vunpack.c.l.b16 %v360
      %v585 = vunpack.c.h.b16 %v360
      %v586 = vunpack.c.l.b16 %v361
      %v587 = vunpack.c.h.b16 %v361
      %v588 = vunpack.c.l.b16 %v362
      %v589 = vunpack.c.h.b16 %v362
      %v590 = vunpack.c.l.b16 %v363
      %v591 = vunpack.c.h.b16 %v363
      %v592 = vunpack.c.l.b16 %v364
      %v593 = vunpack.c.h.b16 %v364
      %v594 = vunpack.c.l.b16 %v365
      %v595 = vunpack.c.h.b16 %v365
      %v596 = vunpack.c.l.b16 %v366
      %v597 = vunpack.c.h.b16 %v366
      %v598 = vunpack.c.l.b16 %v367
      %v599 = vunpack.c.h.b16 %v367
      %v600 = vunpack.c.l.b16 %v368
      %v601 = vunpack.c.h.b16 %v368
      %v602 = vunpack.c.l.b16 %v369
      %v603 = vunpack.c.h.b16 %v369
      %v604 = vunpack.c.l.b16 %v370
      %v605 = vunpack.c.h.b16 %v370
      %v606 = vunpack.c.l.b16 %v371
      %v607 = vunpack.c.h.b16 %v371
      %v608 = vunpack.c.l.b16 %v372
      %v609 = vunpack.c.h.b16 %v372
      %v610 = vunpack.c.l.b16 %v373
      %v611 = vunpack.c.h.b16 %v373
      %v612 = vunpack.c.l.b16 %v374
      %v613 = vunpack.c.h.b16 %v374
      %v614 = vunpack.c.l.b16 %v375
      %v615 = vunpack.c.h.b16 %v375
      %v616 = vunpack.c.l.b16 %v376
      %v617 = vunpack.c.h.b16 %v376
      %v618 = vunpack.c.l.b16 %v377
      %v619 = vunpack.c.h.b16 %v377
      %v620 = vunpack.c.l.b16 %v378
      %v621 = vunpack.c.h.b16 %v378
      %v622 = vunpack.c.l.b16 %v379
      %v623 = vunpack.c.h.b16 %v379
      %v624 = vunpack.c.l.b16 %v380
      %v625 = vunpack.c.h.b16 %v380
      %v626 = vunpack.c.l.b16 %v381
      %v627 = vunpack.c.h.b16 %v381
      %v628 = vunpack.c.l.b16 %v382
      %v629 = vunpack.c.h.b16 %v382
      %v630 = vunpack.c.l.b16 %v383
      %v631 = vunpack.c.h.b16 %v383
      %v632 = vunpack.c.l.b16 %v384
      %v633 = vunpack.c.h.b16 %v384
      %v634 = vunpack.c.l.b16 %v385
      %v635 = vunpack.c.h.b16 %v385
      %v636 = vunpack.c.l.b16 %v386
      %v637 = vunpack.c.h.b16 %v386
      %v638 = vunpack.c.l.b16 %v387
      %v639 = vunpack.c.h.b16 %v387
      %v640 = vunpack.c.l.b16 %v388
      %v641 = vunpack.c.h.b16 %v388
      %v642 = vunpack.c.l.b16 %v389
      %v643 = vunpack.c.h.b16 %v389
      %v644 = vunpack.c.l.b16 %v390
      %v645 = vunpack.c.h.b16 %v390
      %v646 = vunpack.c.l.b16 %v391
      %v647 = vunpack.c.h.b16 %v391
      %v648 = vunpack.c.l.b16 %v392
      %v649 = vunpack.c.h.b16 %v392
      %v650 = vunpack.c.l.b16 %v393
      %v651 = vunpack.c.h.b16 %v393
      %v652 = vunpack.c.l.b16 %v394
      %v653 = vunpack.c.h.b16 %v394
      %v654 = vunpack.c.l.b16 %v395
      %v655 = vunpack.c.h.b16 %v395
      %v656 = vunpack.c.l.b16 %v396
      %v657 = vunpack.c.h.b16 %v396
      %v658 = vunpack.c.l.b16 %v397
      %v659 = vunpack.c.h.b16 %v397
      %v660 = vunpack.c.l.b16 %v398
      %v661 = vunpack.c.h.b16 %v398
      %v662 = vunpack.c.l.b16 %v399
      %v663 = vunpack.c.h.b16 %v399
      %v664 = vunpack.c.l.b16 %v400
      %v665 = vunpack.c.h.b16 %v400
      %v666 = vunpack.c.l.b16 %v401
      %v667 = vunpack.c.h.b16 %v401
      %v668 = vunpack.c.l.b16 %v402
      %v669 = vunpack.c.h.b16 %v402
      %v670 = vunpack.c.l.b16 %v403
      %v671 = vunpack.c.h.b16 %v403
      %v672 = vpack.c.b16 %v548, %v544
      %v673 = vpack.c.b16 %v549, %v545
      %v674 = vpack.c.b16 %v550, %v546
      %v675 = vpack.c.b16 %v551, %v547
      %v676 = vpack.c.b16 %v556, %v552
      %v677 = vpack.c.b16 %v557, %v553
      %v678 = vpack.c.b16 %v558, %v554
      %v679 = vpack.c.b16 %v559, %v555
      %v680 = vpack.c.b16 %v564, %v560
      %v681 = vpack.c.b16 %v565, %v561
      %v682 = vpack.c.b16 %v566, %v562
      %v683 = vpack.c.b16 %v567, %v563
      %v684 = vpack.c.b16 %v572, %v568
      %v685 = vpack.c.b16 %v573, %v569
      %v686 = vpack.c.b16 %v574, %v570
      %v687 = vpack.c.b16 %v575, %v571
      %v688 = vpack.c.b16 %v580, %v576
      %v689 = vpack.c.b16 %v581, %v577
      %v690 = vpack.c.b16 %v582, %v578
      %v691 = vpack.c.b16 %v583, %v579
      %v692 = vpack.c.b16 %v588, %v584
      %v693 = vpack.c.b16 %v589, %v585
      %v694 = vpack.c.b16 %v590, %v586
      %v695 = vpack.c.b16 %v591, %v587
      %v696 = vpack.c.b16 %v596, %v592
      %v697 = vpack.c.b16 %v597, %v593
      %v698 = vpack.c.b16 %v598, %v594
      %v699 = vpack.c.b16 %v599, %v595
      %v700 = vpack.c.b16 %v604, %v600
      %v701 = vpack.c.b16 %v605, %v601
      %v702 = vpack.c.b16 %v606, %v602
      %v703 = vpack.c.b16 %v607, %v603
      %v704 = vpack.c.b16 %v612, %v608
      %v705 = vpack.c.b16 %v613, %v609
      %v706 = vpack.c.b16 %v614, %v610
      %v707 = vpack.c.b16 %v615, %v611
      %v708 = vpack.c.b16 %v620, %v616
      %v709 = vpack.c.b16 %v621, %v617
      %v710 = vpack.c.b16 %v622, %v618
      %v711 = vpack.c.b16 %v623, %v619
      %v712 = vpack.c.b16 %v628, %v624
      %v713 = vpack.c.b16 %v629, %v625
      %v714 = vpack.c.b16 %v630, %v626
      %v715 = vpack.c.b16 %v631, %v627
      %v716 = vpack.c.b16 %v636, %v632
      %v717 = vpack.c.b16 %v637, %v633
      %v718 = vpack.c.b16 %v638, %v634
      %v719 = vpack.c.b16 %v639, %v635
      %v720 = vpack.c.b16 %v644, %v640
      %v721 = vpack.c.b16 %v645, %v641
      %v722 = vpack.c.b16 %v646, %v642
      %v723 = vpack.c.b16 %v647, %v643
      %v724 = vpack.c.b16 %v652, %v648
      %v725 = vpack.c.b16 %v653, %v649
      %v726 = vpack.c.b16 %v654, %v650
      %v727 = vpack.c.b16 %v655, %v651
      %v728 = vpack.c.b16 %v660, %v656
      %v729 = vpack.c.b16 %v661, %v657
      %v730 = vpack.c.b16 %v662, %v658
      %v731 = vpack.c.b16 %v663, %v659
      %v732 = vpack.c.b16 %v668, %v664
      %v733 = vpack.c.b16 %v669, %v665
      %v734 = vpack.c.b16 %v670, %v666
      %v735 = vpack.c.b16 %v671, %v667
      %v864 = vunpack.c.l.b16 %v404
      %v865 = vunpack.c.h.b16 %v404
      %v866 = vunpack.c.l.b16 %v405
      %v867 = vunpack.c.h.b16 %v405
      %v868 = vunpack.c.l.b16 %v406
      %v869 = vunpack.c.h.b16 %v406
      %v870 = vunpack.c.l.b16 %v407
      %v871 = vunpack.c.h.b16 %v407
      %v872 = vunpack.c.l.b16 %v408
      %v873 = vunpack.c.h.b16 %v408
      %v874 = vunpack.c.l.b16 %v409
      %v875 = vunpack.c.h.b16 %v409
      %v876 = vunpack.c.l.b16 %v410
      %v877 = vunpack.c.h.b16 %v410
      %v878 = vunpack.c.l.b16 %v411
      %v879 = vunpack.c.h.b16 %v411
      %v880 = vunpack.c.l.b16 %v412
      %v881 = vunpack.c.h.b16 %v412
      %v882 = vunpack.c.l.b16 %v413
      %v883 = vunpack.c.h.b16 %v413
      %v884 = vunpack.c.l.b16 %v414
      %v885 = vunpack.c.h.b16 %v414
      %v886 = vunpack.c.l.b16 %v415
      %v887 = vunpack.c.h.b16 %v415
      %v888 = vunpack.c.l.b16 %v416
      %v889 = vunpack.c.h.b16 %v416
      %v890 = vunpack.c.l.b16 %v417
      %v891 = vunpack.c.h.b16 %v417
      %v892 = vunpack.c.l.b16 %v418
      %v893 = vunpack.c.h.b16 %v418
      %v894 = vunpack.c.l.b16 %v419
      %v895 = vunpack.c.h.b16 %v419
      %v896 = vunpack.c.l.b16 %v420
      %v897 = vunpack.c.h.b16 %v420
      %v898 = vunpack.c.l.b16 %v421
      %v899 = vunpack.c.h.b16 %v421
      %v900 = vunpack.c.l.b16 %v422
      %v901 = vunpack.c.h.b16 %v422
      %v902 = vunpack.c.l.b16 %v423
      %v903 = vunpack.c.h.b16 %v423
      %v904 = vunpack.c.l.b16 %v424
      %v905 = vunpack.c.h.b16 %v424
      %v906 = vunpack.c.l.b16 %v425
      %v907 = vunpack.c.h.b16 %v425
      %v908 = vunpack.c.l.b16 %v426
      %v909 = vunpack.c.h.b16 %v426
      %v910 = vunpack.c.l.b16 %v427
      %v911 = vunpack.c.h.b16 %v427
      %v912 = vunpack.c.l.b16 %v428
      %v913 = vunpack.c.h.b16 %v428
      %v914 = vunpack.c.l.b16 %v429
      %v915 = vunpack.c.h.b16 %v429
      %v916 = vunpack.c.l.b16 %v430
      %v917 = vunpack.c.h.b16 %v430
      %v918 = vunpack.c.l.b16 %v431
      %v919 = vunpack.c.h.b16 %v431
      %v920 = vunpack.c.l.b16 %v432
      %v921 = vunpack.c.h.b16 %v432
      %v922 = vunpack.c.l.b16 %v433
      %v923 = vunpack.c.h.b16 %v433
      %v924 = vunpack.c.l.b16 %v434
      %v925 = vunpack.c.h.b16 %v434
      %v926 = vunpack.c.l.b16 %v435
      %v927 = vunpack.c.h.b16 %v435
      %v928 = vunpack.c.l.b16 %v436
      %v929 = vunpack.c.h.b16 %v436
      %v930 = vunpack.c.l.b16 %v437
      %v931 = vunpack.c.h.b16 %v437
      %v932 = vunpack.c.l.b16 %v438
      %v933 = vunpack.c.h.b16 %v438
      %v934 = vunpack.c.l.b16 %v439
      %v935 = vunpack.c.h.b16 %v439
      %v936 = vunpack.c.l.b16 %v440
      %v937 = vunpack.c.h.b16 %v440
      %v938 = vunpack.c.l.b16 %v441
      %v939 = vunpack.c.h.b16 %v441
      %v940 = vunpack.c.l.b16 %v442
      %v941 = vunpack.c.h.b16 %v442
      %v942 = vunpack.c.l.b16 %v443
      %v943 = vunpack.c.h.b16 %v443
      %v944 = vunpack.c.l.b16 %v444
      %v945 = vunpack.c.h.b16 %v444
      %v946 = vunpack.c.l.b16 %v445
      %v947 = vunpack.c.h.b16 %v445
      %v948 = vunpack.c.l.b16 %v446
      %v949 = vunpack.c.h.b16 %v446
      %v950 = vunpack.c.l.b16 %v447
      %v951 = vunpack.c.h.b16 %v447
      %v952 = vunpack.c.l.b16 %v448
      %v953 = vunpack.c.h.b16 %v448
      %v954 = vunpack.c.l.b16 %v449
      %v955 = vunpack.c.h.b16 %v449
      %v956 = vunpack.c.l.b16 %v450
      %v957 = vunpack.c.h.b16 %v450
      %v958 = vunpack.c.l.b16 %v451
      %v959 = vunpack.c.h.b16 %v451
      %v960 = vunpack.c.l.b16 %v452
      %v961 = vunpack.c.h.b16 %v452
      %v962 = vunpack.c.l.b16 %v453
      %v963 = vunpack.c.h.b16 %v453
      %v964 = vunpack.c.l.b16 %v454
      %v965 = vunpack.c.h.b16 %v454
      %v966 = vunpack.c.l.b16 %v455
      %v967 = vunpack.c.h.b16 %v455
      %v968 = vunpack.c.l.b16 %v456
      %v969 = vunpack.c.h.b16 %v456
      %v970 = vunpack.c.l.b16 %v457
      %v971 = vunpack.c.h.b16 %v457
      %v972 = vunpack.c.l.b16 %v458
      %v973 = vunpack.c.h.b16 %v458
      %v974 = vunpack.c.l.b16 %v459
      %v975 = vunpack.c.h.b16 %v459
      %v976 = vunpack.c.l.b16 %v460
      %v977 = vunpack.c.h.b16 %v460
      %v978 = vunpack.c.l.b16 %v461
      %v979 = vunpack.c.h.b16 %v461
      %v980 = vunpack.c.l.b16 %v462
      %v981 = vunpack.c.h.b16 %v462
      %v982 = vunpack.c.l.b16 %v463
      %v983 = vunpack.c.h.b16 %v463
      %v984 = vunpack.c.l.b16 %v464
      %v985 = vunpack.c.h.b16 %v464
      %v986 = vunpack.c.l.b16 %v465
      %v987 = vunpack.c.h.b16 %v465
      %v988 = vunpack.c.l.b16 %v466
      %v989 = vunpack.c.h.b16 %v466
      %v990 = vunpack.c.l.b16 %v467
      %v991 = vunpack.c.h.b16 %v467
      %v992 = vpack.c.b16 %v866, %v864
      %v993 = vpack.c.b16 %v867, %v865
      %v994 = vpack.c.b16 %v870, %v868
      %v995 = vpack.c.b16 %v871, %v869
      %v996 = vpack.c.b16 %v874, %v872
      %v997 = vpack.c.b16 %v875, %v873
      %v998 = vpack.c.b16 %v878, %v876
      %v999 = vpack.c.b16 %v879, %v877
      %v1000 = vpack.c.b16 %v882, %v880
      %v1001 = vpack.c.b16 %v883, %v881
      %v1002 = vpack.c.b16 %v886, %v884
      %v1003 = vpack.c.b16 %v887, %v885
      %v1004 = vpack.c.b16 %v890, %v888
      %v1005 = vpack.c.b16 %v891, %v889
      %v1006 = vpack.c.b16 %v894, %v892
      %v1007 = vpack.c.b16 %v895, %v893
      %v1008 = vpack.c.b16 %v898, %v896
      %v1009 = vpack.c.b16 %v899, %v897
      %v1010 = vpack.c.b16 %v902, %v900
      %v1011 = vpack.c.b16 %v903, %v901
      %v1012 = vpack.c.b16 %v906, %v904
      %v1013 = vpack.c.b16 %v907, %v905
      %v1014 = vpack.c.b16 %v910, %v908
      %v1015 = vpack.c.b16 %v911, %v909
      %v1016 = vpack.c.b16 %v914, %v912
      %v1017 = vpack.c.b16 %v915, %v913
      %v1018 = vpack.c.b16 %v918, %v916
      %v1019 = vpack.c.b16 %v919, %v917
      %v1020 = vpack.c.b16 %v922, %v920
      %v1021 = vpack.c.b16 %v923, %v921
      %v1022 = vpack.c.b16 %v926, %v924
      %v1023 = vpack.c.b16 %v927, %v925
      %v1024 = vpack.c.b16 %v930, %v928
      %v1025 = vpack.c.b16 %v931, %v929
      %v1026 = vpack.c.b16 %v934, %v932
      %v1027 = vpack.c.b16 %v935, %v933
      %v1028 = vpack.c.b16 %v938, %v936
      %v1029 = vpack.c.b16 %v939, %v937
      %v1030 = vpack.c.b16 %v942, %v940
      %v1031 = vpack.c.b16 %v943, %v941
      %v1032 = vpack.c.b16 %v946, %v944
      %v1033 = vpack.c.b16 %v947, %v945
      %v1034 = vpack.c.b16 %v950, %v948
      %v1035 = vpack.c.b16 %v951, %v949
      %v1036 = vpack.c.b16 %v954, %v952
      %v1037 = vpack.c.b16 %v955, %v953
      %v1038 = vpack.c.b16 %v958, %v956
      %v1039 = vpack.c.b16 %v959, %v957
      %v1040 = vpack.c.b16 %v962, %v960
      %v1041 = vpack.c.b16 %v963, %v961
      %v1042 = vpack.c.b16 %v966, %v964
      %v1043 = vpack.c.b16 %v967, %v965
      %v1044 = vpack.c.b16 %v970, %v968
      %v1045 = vpack.c.b16 %v971, %v969
      %v1046 = vpack.c.b16 %v974, %v972
      %v1047 = vpack.c.b16 %v975, %v973
      %v1048 = vpack.c.b16 %v978, %v976
      %v1049 = vpack.c.b16 %v979, %v977
      %v1050 = vpack.c.b16 %v982, %v980
      %v1051 = vpack.c.b16 %v983, %v981
      %v1052 = vpack.c.b16 %v986, %v984
      %v1053 = vpack.c.b16 %v987, %v985
      %v1054 = vpack.c.b16 %v990, %v988
      %v1055 = vpack.c.b16 %v991, %v989
      %1120 = vmatprep.subr.bf16.mxu0 %v993
      %1121 = vmatpush1.bf16.msra.mxu0 %v992
      %1122 = vmatprep.subr.bf16.mxu0 %v995
      %1123 = vmatpush1.bf16.msra.mxu0 %v994
      %1124 = vmatprep.subr.bf16.mxu0 %v997
      %1125 = vmatpush1.bf16.msra.mxu0 %v996
      %1126 = vmatprep.subr.bf16.mxu0 %v999
      %1127 = vmatpush1.bf16.msra.mxu0 %v998
      %1128 = vmatprep.subr.bf16.mxu0 %v1001
      %1129 = vmatpush1.bf16.msra.mxu0 %v1000
      %1130 = vmatprep.subr.bf16.mxu0 %v1003
      %1131 = vmatpush1.bf16.msra.mxu0 %v1002
      %1132 = vmatprep.subr.bf16.mxu0 %v1005
      %1133 = vmatpush1.bf16.msra.mxu0 %v1004
      %1134 = vmatprep.subr.bf16.mxu0 %v1007
      %1135 = vmatpush1.bf16.msra.mxu0 %v1006
      %1136 = vmatprep.subr.bf16.mxu0 %v1009
      %1137 = vmatpush1.bf16.msra.mxu0 %v1008
      %1138 = vmatprep.subr.bf16.mxu0 %v1011
      %1139 = vmatpush1.bf16.msra.mxu0 %v1010
      %1140 = vmatprep.subr.bf16.mxu0 %v1013
      %1141 = vmatpush1.bf16.msra.mxu0 %v1012
      %1142 = vmatprep.subr.bf16.mxu0 %v1015
      %1143 = vmatpush1.bf16.msra.mxu0 %v1014
      %1144 = vmatprep.subr.bf16.mxu0 %v1017
      %1145 = vmatpush1.bf16.msra.mxu0 %v1016
      %1146 = vmatprep.subr.bf16.mxu0 %v1019
      %1147 = vmatpush1.bf16.msra.mxu0 %v1018
      %1148 = vmatprep.subr.bf16.mxu0 %v1021
      %1149 = vmatpush1.bf16.msra.mxu0 %v1020
      %1150 = vmatprep.subr.bf16.mxu0 %v1023
      %1151 = vmatpush1.bf16.msra.mxu0 %v1022
      %1152 = vmatprep.mubr.bf16.mxu0 %v673
      %1153 = vmatmul.mubr.bf16.gmra.mrb[0].mxu0 %v672
      %v1154 = vpop.f32.mrb[0].mxu0
      %v1155 = vadd.f32 %v473, %v1154
      %v1156 = vpop.f32.mrb[0].mxu0
      %v1157 = vadd.f32 %v477, %v1156
      %v1158 = vpop.f32.mrb[0].mxu0
      %v1159 = vadd.f32 %v473, %v1158
      %v1160 = vpop.f32.mrb[0].mxu0
      %v1161 = vadd.f32 %v477, %v1160
      %1162 = vmatprep.mubr.bf16.mxu0 %v677
      %1163 = vmatmul.mubr.bf16.gmra.mrb[0].mxu0 %v676
      %v1164 = vpop.f32.mrb[0].mxu0
      %v1165 = vadd.f32 %v473, %v1164
      %v1166 = vpop.f32.mrb[0].mxu0
      %v1167 = vadd.f32 %v477, %v1166
      %v1168 = vpop.f32.mrb[0].mxu0
      %v1169 = vadd.f32 %v473, %v1168
      %v1170 = vpop.f32.mrb[0].mxu0
      %v1171 = vadd.f32 %v477, %v1170
      %1172 = vmatprep.mubr.bf16.mxu0 %v681
      %1173 = vmatmul.mubr.bf16.gmra.mrb[0].mxu0 %v680
      %v1174 = vpop.f32.mrb[0].mxu0
      %v1175 = vadd.f32 %v473, %v1174
      %v1176 = vpop.f32.mrb[0].mxu0
      %v1177 = vadd.f32 %v477, %v1176
      %v1178 = vpop.f32.mrb[0].mxu0
      %v1179 = vadd.f32 %v473, %v1178
      %v1180 = vpop.f32.mrb[0].mxu0
      %v1181 = vadd.f32 %v477, %v1180
      %1182 = vmatprep.mubr.bf16.mxu0 %v685
      %1183 = vmatmul.mubr.bf16.gmra.mrb[0].mxu0 %v684
      %v1184 = vpop.f32.mrb[0].mxu0
      %v1185 = vadd.f32 %v473, %v1184
      %v1186 = vpop.f32.mrb[0].mxu0
      %v1187 = vadd.f32 %v477, %v1186
      %v1188 = vpop.f32.mrb[0].mxu0
      %v1189 = vadd.f32 %v473, %v1188
      %v1190 = vpop.f32.mrb[0].mxu0
      %v1191 = vadd.f32 %v477, %v1190
      %1192 = vmatprep.mubr.bf16.mxu0 %v689
      %1193 = vmatmul.mubr.bf16.gmra.mrb[0].mxu0 %v688
      %v1194 = vpop.f32.mrb[0].mxu0
      %v1195 = vadd.f32 %v473, %v1194
      %v1196 = vpop.f32.mrb[0].mxu0
      %v1197 = vadd.f32 %v477, %v1196
      %v1198 = vpop.f32.mrb[0].mxu0
      %v1199 = vadd.f32 %v473, %v1198
      %v1200 = vpop.f32.mrb[0].mxu0
      %v1201 = vadd.f32 %v477, %v1200
      %1202 = vmatprep.mubr.bf16.mxu0 %v693
      %1203 = vmatmul.mubr.bf16.gmra.mrb[0].mxu0 %v692
      %v1204 = vpop.f32.mrb[0].mxu0
      %v1205 = vadd.f32 %v473, %v1204
      %v1206 = vpop.f32.mrb[0].mxu0
      %v1207 = vadd.f32 %v477, %v1206
      %v1208 = vpop.f32.mrb[0].mxu0
      %v1209 = vadd.f32 %v473, %v1208
      %v1210 = vpop.f32.mrb[0].mxu0
      %v1211 = vadd.f32 %v477, %v1210
      %1212 = vmatprep.mubr.bf16.mxu0 %v697
      %1213 = vmatmul.mubr.bf16.gmra.mrb[0].mxu0 %v696
      %v1214 = vpop.f32.mrb[0].mxu0
      %v1215 = vadd.f32 %v473, %v1214
      %v1216 = vpop.f32.mrb[0].mxu0
      %v1217 = vadd.f32 %v477, %v1216
      %v1218 = vpop.f32.mrb[0].mxu0
      %v1219 = vadd.f32 %v473, %v1218
      %v1220 = vpop.f32.mrb[0].mxu0
      %v1221 = vadd.f32 %v477, %v1220
      %1222 = vmatprep.mubr.bf16.mxu0 %v701
      %1223 = vmatmul.mubr.bf16.gmra.mrb[0].mxu0 %v700
      %v1224 = vpop.f32.mrb[0].mxu0
      %v1225 = vadd.f32 %v473, %v1224
      %v1226 = vpop.f32.mrb[0].mxu0
      %v1227 = vadd.f32 %v477, %v1226
      %v1228 = vpop.f32.mrb[0].mxu0
      %v1229 = vadd.f32 %v473, %v1228
      %v1230 = vpop.f32.mrb[0].mxu0
      %v1231 = vadd.f32 %v477, %v1230
      %1232 = vmatprep.mubr.bf16.mxu0 %v705
      %1233 = vmatmul.mubr.bf16.gmra.mrb[0].mxu0 %v704
      %v1234 = vpop.f32.mrb[0].mxu0
      %v1235 = vadd.f32 %v473, %v1234
      %v1236 = vpop.f32.mrb[0].mxu0
      %v1237 = vadd.f32 %v477, %v1236
      %v1238 = vpop.f32.mrb[0].mxu0
      %v1239 = vadd.f32 %v473, %v1238
      %v1240 = vpop.f32.mrb[0].mxu0
      %v1241 = vadd.f32 %v477, %v1240
      %1242 = vmatprep.mubr.bf16.mxu0 %v709
      %1243 = vmatmul.mubr.bf16.gmra.mrb[0].mxu0 %v708
      %v1244 = vpop.f32.mrb[0].mxu0
      %v1245 = vadd.f32 %v473, %v1244
      %v1246 = vpop.f32.mrb[0].mxu0
      %v1247 = vadd.f32 %v477, %v1246
      %v1248 = vpop.f32.mrb[0].mxu0
      %v1249 = vadd.f32 %v473, %v1248
      %v1250 = vpop.f32.mrb[0].mxu0
      %v1251 = vadd.f32 %v477, %v1250
      %1252 = vmatprep.mubr.bf16.mxu0 %v713
      %1253 = vmatmul.mubr.bf16.gmra.mrb[0].mxu0 %v712
      %v1254 = vpop.f32.mrb[0].mxu0
      %v1255 = vadd.f32 %v473, %v1254
      %v1256 = vpop.f32.mrb[0].mxu0
      %v1257 = vadd.f32 %v477, %v1256
      %v1258 = vpop.f32.mrb[0].mxu0
      %v1259 = vadd.f32 %v473, %v1258
      %v1260 = vpop.f32.mrb[0].mxu0
      %v1261 = vadd.f32 %v477, %v1260
      %1262 = vmatprep.mubr.bf16.mxu0 %v717
      %1263 = vmatmul.mubr.bf16.gmra.mrb[0].mxu0 %v716
      %v1264 = vpop.f32.mrb[0].mxu0
      %v1265 = vadd.f32 %v473, %v1264
      %v1266 = vpop.f32.mrb[0].mxu0
      %v1267 = vadd.f32 %v477, %v1266
      %v1268 = vpop.f32.mrb[0].mxu0
      %v1269 = vadd.f32 %v473, %v1268
      %v1270 = vpop.f32.mrb[0].mxu0
      %v1271 = vadd.f32 %v477, %v1270
      %1272 = vmatprep.mubr.bf16.mxu0 %v721
      %1273 = vmatmul.mubr.bf16.gmra.mrb[0].mxu0 %v720
      %v1274 = vpop.f32.mrb[0].mxu0
      %v1275 = vadd.f32 %v473, %v1274
      %v1276 = vpop.f32.mrb[0].mxu0
      %v1277 = vadd.f32 %v477, %v1276
      %v1278 = vpop.f32.mrb[0].mxu0
      %v1279 = vadd.f32 %v473, %v1278
      %v1280 = vpop.f32.mrb[0].mxu0
      %v1281 = vadd.f32 %v477, %v1280
      %1282 = vmatprep.mubr.bf16.mxu0 %v725
      %1283 = vmatmul.mubr.bf16.gmra.mrb[0].mxu0 %v724
      %v1284 = vpop.f32.mrb[0].mxu0
      %v1285 = vadd.f32 %v473, %v1284
      %v1286 = vpop.f32.mrb[0].mxu0
      %v1287 = vadd.f32 %v477, %v1286
      %v1288 = vpop.f32.mrb[0].mxu0
      %v1289 = vadd.f32 %v473, %v1288
      %v1290 = vpop.f32.mrb[0].mxu0
      %v1291 = vadd.f32 %v477, %v1290
      %1292 = vmatprep.mubr.bf16.mxu0 %v729
      %1293 = vmatmul.mubr.bf16.gmra.mrb[0].mxu0 %v728
      %v1294 = vpop.f32.mrb[0].mxu0
      %v1295 = vadd.f32 %v473, %v1294
      %v1296 = vpop.f32.mrb[0].mxu0
      %v1297 = vadd.f32 %v477, %v1296
      %v1298 = vpop.f32.mrb[0].mxu0
      %v1299 = vadd.f32 %v473, %v1298
      %v1300 = vpop.f32.mrb[0].mxu0
      %v1301 = vadd.f32 %v477, %v1300
      %1302 = vmatprep.mubr.bf16.mxu0 %v733
      %1303 = vmatmul.mubr.bf16.gmra.mrb[0].mxu0 %v732
      %v1304 = vpop.f32.mrb[0].mxu0
      %v1305 = vadd.f32 %v473, %v1304
      %v1306 = vpop.f32.mrb[0].mxu0
      %v1307 = vadd.f32 %v477, %v1306
      %v1308 = vpop.f32.mrb[0].mxu0
      %v1309 = vadd.f32 %v473, %v1308
      %v1310 = vpop.f32.mrb[0].mxu0
      %v1311 = vadd.f32 %v477, %v1310
      %1312 = vdwg.mxu0
      %1313 = vmatprep.subr.bf16.mxu0 %v1025
      %1314 = vmatpush1.bf16.msra.mxu0 %v1024
      %1315 = vmatprep.subr.bf16.mxu0 %v1027
      %1316 = vmatpush1.bf16.msra.mxu0 %v1026
      %1317 = vmatprep.subr.bf16.mxu0 %v1029
      %1318 = vmatpush1.bf16.msra.mxu0 %v1028
      %1319 = vmatprep.subr.bf16.mxu0 %v1031
      %1320 = vmatpush1.bf16.msra.mxu0 %v1030
      %1321 = vmatprep.subr.bf16.mxu0 %v1033
      %1322 = vmatpush1.bf16.msra.mxu0 %v1032
      %1323 = vmatprep.subr.bf16.mxu0 %v1035
      %1324 = vmatpush1.bf16.msra.mxu0 %v1034
      %1325 = vmatprep.subr.bf16.mxu0 %v1037
      %1326 = vmatpush1.bf16.msra.mxu0 %v1036
      %1327 = vmatprep.subr.bf16.mxu0 %v1039
      %1328 = vmatpush1.bf16.msra.mxu0 %v1038
      %1329 = vmatprep.subr.bf16.mxu0 %v1041
      %1330 = vmatpush1.bf16.msra.mxu0 %v1040
      %1331 = vmatprep.subr.bf16.mxu0 %v1043
      %1332 = vmatpush1.bf16.msra.mxu0 %v1042
      %1333 = vmatprep.subr.bf16.mxu0 %v1045
      %1334 = vmatpush1.bf16.msra.mxu0 %v1044
      %1335 = vmatprep.subr.bf16.mxu0 %v1047
      %1336 = vmatpush1.bf16.msra.mxu0 %v1046
      %1337 = vmatprep.subr.bf16.mxu0 %v1049
      %1338 = vmatpush1.bf16.msra.mxu0 %v1048
      %1339 = vmatprep.subr.bf16.mxu0 %v1051
      %1340 = vmatpush1.bf16.msra.mxu0 %v1050
      %1341 = vmatprep.subr.bf16.mxu0 %v1053
      %1342 = vmatpush1.bf16.msra.mxu0 %v1052
      %1343 = vmatprep.subr.bf16.mxu0 %v1055
      %1344 = vmatpush1.bf16.msra.mxu0 %v1054
      %1345 = vmatprep.mubr.bf16.mxu0 %v675
      %1346 = vmatmul.mubr.bf16.gmra.mrb[0].mxu0 %v674
      %v1347 = vpop.f32.mrb[0].mxu0
      %v1348 = vadd.f32 %v1155, %v1347
      %v1349 = vpop.f32.mrb[0].mxu0
      %v1350 = vadd.f32 %v1157, %v1349
      %v1351 = vpop.f32.mrb[0].mxu0
      %v1352 = vadd.f32 %v1159, %v1351
      %v1353 = vpop.f32.mrb[0].mxu0
      %v1354 = vadd.f32 %v1161, %v1353
      %1355 = vmatprep.mubr.bf16.mxu0 %v679
      %1356 = vmatmul.mubr.bf16.gmra.mrb[0].mxu0 %v678
      %v1357 = vpop.f32.mrb[0].mxu0
      %v1358 = vadd.f32 %v1165, %v1357
      %v1359 = vpop.f32.mrb[0].mxu0
      %v1360 = vadd.f32 %v1167, %v1359
      %v1361 = vpop.f32.mrb[0].mxu0
      %v1362 = vadd.f32 %v1169, %v1361
      %v1363 = vpop.f32.mrb[0].mxu0
      %v1364 = vadd.f32 %v1171, %v1363
      %1365 = vmatprep.mubr.bf16.mxu0 %v683
      %1366 = vmatmul.mubr.bf16.gmra.mrb[0].mxu0 %v682
      %v1367 = vpop.f32.mrb[0].mxu0
      %v1368 = vadd.f32 %v1175, %v1367
      %v1369 = vpop.f32.mrb[0].mxu0
      %v1370 = vadd.f32 %v1177, %v1369
      %v1371 = vpop.f32.mrb[0].mxu0
      %v1372 = vadd.f32 %v1179, %v1371
      %v1373 = vpop.f32.mrb[0].mxu0
      %v1374 = vadd.f32 %v1181, %v1373
      %1375 = vmatprep.mubr.bf16.mxu0 %v687
      %1376 = vmatmul.mubr.bf16.gmra.mrb[0].mxu0 %v686
      %v1377 = vpop.f32.mrb[0].mxu0
      %v1378 = vadd.f32 %v1185, %v1377
      %v1379 = vpop.f32.mrb[0].mxu0
      %v1380 = vadd.f32 %v1187, %v1379
      %v1381 = vpop.f32.mrb[0].mxu0
      %v1382 = vadd.f32 %v1189, %v1381
      %v1383 = vpop.f32.mrb[0].mxu0
      %v1384 = vadd.f32 %v1191, %v1383
      %1385 = vmatprep.mubr.bf16.mxu0 %v691
      %1386 = vmatmul.mubr.bf16.gmra.mrb[0].mxu0 %v690
      %v1387 = vpop.f32.mrb[0].mxu0
      %v1388 = vadd.f32 %v1195, %v1387
      %v1389 = vpop.f32.mrb[0].mxu0
      %v1390 = vadd.f32 %v1197, %v1389
      %v1391 = vpop.f32.mrb[0].mxu0
      %v1392 = vadd.f32 %v1199, %v1391
      %v1393 = vpop.f32.mrb[0].mxu0
      %v1394 = vadd.f32 %v1201, %v1393
      %1395 = vmatprep.mubr.bf16.mxu0 %v695
      %1396 = vmatmul.mubr.bf16.gmra.mrb[0].mxu0 %v694
      %v1397 = vpop.f32.mrb[0].mxu0
      %v1398 = vadd.f32 %v1205, %v1397
      %v1399 = vpop.f32.mrb[0].mxu0
      %v1400 = vadd.f32 %v1207, %v1399
      %v1401 = vpop.f32.mrb[0].mxu0
      %v1402 = vadd.f32 %v1209, %v1401
      %v1403 = vpop.f32.mrb[0].mxu0
      %v1404 = vadd.f32 %v1211, %v1403
      %1405 = vmatprep.mubr.bf16.mxu0 %v699
      %1406 = vmatmul.mubr.bf16.gmra.mrb[0].mxu0 %v698
      %v1407 = vpop.f32.mrb[0].mxu0
      %v1408 = vadd.f32 %v1215, %v1407
      %v1409 = vpop.f32.mrb[0].mxu0
      %v1410 = vadd.f32 %v1217, %v1409
      %v1411 = vpop.f32.mrb[0].mxu0
      %v1412 = vadd.f32 %v1219, %v1411
      %v1413 = vpop.f32.mrb[0].mxu0
      %v1414 = vadd.f32 %v1221, %v1413
      %1415 = vmatprep.mubr.bf16.mxu0 %v703
      %1416 = vmatmul.mubr.bf16.gmra.mrb[0].mxu0 %v702
      %v1417 = vpop.f32.mrb[0].mxu0
      %v1418 = vadd.f32 %v1225, %v1417
      %v1419 = vpop.f32.mrb[0].mxu0
      %v1420 = vadd.f32 %v1227, %v1419
      %v1421 = vpop.f32.mrb[0].mxu0
      %v1422 = vadd.f32 %v1229, %v1421
      %v1423 = vpop.f32.mrb[0].mxu0
      %v1424 = vadd.f32 %v1231, %v1423
      %1425 = vmatprep.mubr.bf16.mxu0 %v707
      %1426 = vmatmul.mubr.bf16.gmra.mrb[0].mxu0 %v706
      %v1427 = vpop.f32.mrb[0].mxu0
      %v1428 = vadd.f32 %v1235, %v1427
      %v1429 = vpop.f32.mrb[0].mxu0
      %v1430 = vadd.f32 %v1237, %v1429
      %v1431 = vpop.f32.mrb[0].mxu0
      %v1432 = vadd.f32 %v1239, %v1431
      %v1433 = vpop.f32.mrb[0].mxu0
      %v1434 = vadd.f32 %v1241, %v1433
      %1435 = vmatprep.mubr.bf16.mxu0 %v711
      %1436 = vmatmul.mubr.bf16.gmra.mrb[0].mxu0 %v710
      %v1437 = vpop.f32.mrb[0].mxu0
      %v1438 = vadd.f32 %v1245, %v1437
      %v1439 = vpop.f32.mrb[0].mxu0
      %v1440 = vadd.f32 %v1247, %v1439
      %v1441 = vpop.f32.mrb[0].mxu0
      %v1442 = vadd.f32 %v1249, %v1441
      %v1443 = vpop.f32.mrb[0].mxu0
      %v1444 = vadd.f32 %v1251, %v1443
      %1445 = vmatprep.mubr.bf16.mxu0 %v715
      %1446 = vmatmul.mubr.bf16.gmra.mrb[0].mxu0 %v714
      %v1447 = vpop.f32.mrb[0].mxu0
      %v1448 = vadd.f32 %v1255, %v1447
      %v1449 = vpop.f32.mrb[0].mxu0
      %v1450 = vadd.f32 %v1257, %v1449
      %v1451 = vpop.f32.mrb[0].mxu0
      %v1452 = vadd.f32 %v1259, %v1451
      %v1453 = vpop.f32.mrb[0].mxu0
      %v1454 = vadd.f32 %v1261, %v1453
      %1455 = vmatprep.mubr.bf16.mxu0 %v719
      %1456 = vmatmul.mubr.bf16.gmra.mrb[0].mxu0 %v718
      %v1457 = vpop.f32.mrb[0].mxu0
      %v1458 = vadd.f32 %v1265, %v1457
      %v1459 = vpop.f32.mrb[0].mxu0
      %v1460 = vadd.f32 %v1267, %v1459
      %v1461 = vpop.f32.mrb[0].mxu0
      %v1462 = vadd.f32 %v1269, %v1461
      %v1463 = vpop.f32.mrb[0].mxu0
      %v1464 = vadd.f32 %v1271, %v1463
      %1465 = vmatprep.mubr.bf16.mxu0 %v723
      %1466 = vmatmul.mubr.bf16.gmra.mrb[0].mxu0 %v722
      %v1467 = vpop.f32.mrb[0].mxu0
      %v1468 = vadd.f32 %v1275, %v1467
      %v1469 = vpop.f32.mrb[0].mxu0
      %v1470 = vadd.f32 %v1277, %v1469
      %v1471 = vpop.f32.mrb[0].mxu0
      %v1472 = vadd.f32 %v1279, %v1471
      %v1473 = vpop.f32.mrb[0].mxu0
      %v1474 = vadd.f32 %v1281, %v1473
      %1475 = vmatprep.mubr.bf16.mxu0 %v727
      %1476 = vmatmul.mubr.bf16.gmra.mrb[0].mxu0 %v726
      %v1477 = vpop.f32.mrb[0].mxu0
      %v1478 = vadd.f32 %v1285, %v1477
      %v1479 = vpop.f32.mrb[0].mxu0
      %v1480 = vadd.f32 %v1287, %v1479
      %v1481 = vpop.f32.mrb[0].mxu0
      %v1482 = vadd.f32 %v1289, %v1481
      %v1483 = vpop.f32.mrb[0].mxu0
      %v1484 = vadd.f32 %v1291, %v1483
      %1485 = vmatprep.mubr.bf16.mxu0 %v731
      %1486 = vmatmul.mubr.bf16.gmra.mrb[0].mxu0 %v730
      %v1487 = vpop.f32.mrb[0].mxu0
      %v1488 = vadd.f32 %v1295, %v1487
      %v1489 = vpop.f32.mrb[0].mxu0
      %v1490 = vadd.f32 %v1297, %v1489
      %v1491 = vpop.f32.mrb[0].mxu0
      %v1492 = vadd.f32 %v1299, %v1491
      %v1493 = vpop.f32.mrb[0].mxu0
      %v1494 = vadd.f32 %v1301, %v1493
      %1495 = vmatprep.mubr.bf16.mxu0 %v735
      %1496 = vmatmul.mubr.bf16.gmra.mrb[0].mxu0 %v734
      %v1497 = vpop.f32.mrb[0].mxu0
      %v1498 = vadd.f32 %v1305, %v1497
      %v1499 = vpop.f32.mrb[0].mxu0
      %v1500 = vadd.f32 %v1307, %v1499
      %v1501 = vpop.f32.mrb[0].mxu0
      %v1502 = vadd.f32 %v1309, %v1501
      %v1503 = vpop.f32.mrb[0].mxu0
      %v1504 = vadd.f32 %v1311, %v1503
      %1505 = vdwg.mxu0
      %vm1506 = vcmp.ge.f32.partialorder %v1348, 0.0
      %vm1507 = vcmp.ge.f32.partialorder %v1350, 0.0
      %vm1508 = vcmp.ge.f32.partialorder %v1352, 0.0
      %vm1509 = vcmp.ge.f32.partialorder %v1354, 0.0
      %vm1510 = vcmp.ge.f32.partialorder %v1358, 0.0
      %vm1511 = vcmp.ge.f32.partialorder %v1360, 0.0
      %vm1512 = vcmp.ge.f32.partialorder %v1362, 0.0
      %vm1513 = vcmp.ge.f32.partialorder %v1364, 0.0
      %vm1514 = vcmp.ge.f32.partialorder %v1368, 0.0
      %vm1515 = vcmp.ge.f32.partialorder %v1370, 0.0
      %vm1516 = vcmp.ge.f32.partialorder %v1372, 0.0
      %vm1517 = vcmp.ge.f32.partialorder %v1374, 0.0
      %vm1518 = vcmp.ge.f32.partialorder %v1378, 0.0
      %vm1519 = vcmp.ge.f32.partialorder %v1380, 0.0
      %vm1520 = vcmp.ge.f32.partialorder %v1382, 0.0
      %vm1521 = vcmp.ge.f32.partialorder %v1384, 0.0
      %vm1522 = vcmp.ge.f32.partialorder %v1388, 0.0
      %vm1523 = vcmp.ge.f32.partialorder %v1390, 0.0
      %vm1524 = vcmp.ge.f32.partialorder %v1392, 0.0
      %vm1525 = vcmp.ge.f32.partialorder %v1394, 0.0
      %vm1526 = vcmp.ge.f32.partialorder %v1398, 0.0
      %vm1527 = vcmp.ge.f32.partialorder %v1400, 0.0
      %vm1528 = vcmp.ge.f32.partialorder %v1402, 0.0
      %vm1529 = vcmp.ge.f32.partialorder %v1404, 0.0
      %vm1530 = vcmp.ge.f32.partialorder %v1408, 0.0
      %vm1531 = vcmp.ge.f32.partialorder %v1410, 0.0
      %vm1532 = vcmp.ge.f32.partialorder %v1412, 0.0
      %vm1533 = vcmp.ge.f32.partialorder %v1414, 0.0
      %vm1534 = vcmp.ge.f32.partialorder %v1418, 0.0
      %vm1535 = vcmp.ge.f32.partialorder %v1420, 0.0
      %vm1536 = vcmp.ge.f32.partialorder %v1422, 0.0
      %vm1537 = vcmp.ge.f32.partialorder %v1424, 0.0
      %vm1538 = vcmp.ge.f32.partialorder %v1428, 0.0
      %vm1539 = vcmp.ge.f32.partialorder %v1430, 0.0
      %vm1540 = vcmp.ge.f32.partialorder %v1432, 0.0
      %vm1541 = vcmp.ge.f32.partialorder %v1434, 0.0
      %vm1542 = vcmp.ge.f32.partialorder %v1438, 0.0
      %vm1543 = vcmp.ge.f32.partialorder %v1440, 0.0
      %vm1544 = vcmp.ge.f32.partialorder %v1442, 0.0
      %vm1545 = vcmp.ge.f32.partialorder %v1444, 0.0
      %vm1546 = vcmp.ge.f32.partialorder %v1448, 0.0
      %vm1547 = vcmp.ge.f32.partialorder %v1450, 0.0
      %vm1548 = vcmp.ge.f32.partialorder %v1452, 0.0
      %vm1549 = vcmp.ge.f32.partialorder %v1454, 0.0
      %vm1550 = vcmp.ge.f32.partialorder %v1458, 0.0
      %vm1551 = vcmp.ge.f32.partialorder %v1460, 0.0
      %vm1552 = vcmp.ge.f32.partialorder %v1462, 0.0
      %vm1553 = vcmp.ge.f32.partialorder %v1464, 0.0
      %vm1554 = vcmp.ge.f32.partialorder %v1468, 0.0
      %vm1555 = vcmp.ge.f32.partialorder %v1470, 0.0
      %vm1556 = vcmp.ge.f32.partialorder %v1472, 0.0
      %vm1557 = vcmp.ge.f32.partialorder %v1474, 0.0
      %vm1558 = vcmp.ge.f32.partialorder %v1478, 0.0
      %vm1559 = vcmp.ge.f32.partialorder %v1480, 0.0
      %vm1560 = vcmp.ge.f32.partialorder %v1482, 0.0
      %vm1561 = vcmp.ge.f32.partialorder %v1484, 0.0
      %vm1562 = vcmp.ge.f32.partialorder %v1488, 0.0
      %vm1563 = vcmp.ge.f32.partialorder %v1490, 0.0
      %vm1564 = vcmp.ge.f32.partialorder %v1492, 0.0
      %vm1565 = vcmp.ge.f32.partialorder %v1494, 0.0
      %vm1566 = vcmp.ge.f32.partialorder %v1498, 0.0
      %vm1567 = vcmp.ge.f32.partialorder %v1500, 0.0
      %vm1568 = vcmp.ge.f32.partialorder %v1502, 0.0
      %vm1569 = vcmp.ge.f32.partialorder %v1504, 0.0
      %v1570 = vmul.f32 %v1348, 0.2
      %v1571 = vmul.f32 %v1350, 0.2
      %v1572 = vmul.f32 %v1352, 0.2
      %v1573 = vmul.f32 %v1354, 0.2
      %v1574 = vmul.f32 %v1358, 0.2
      %v1575 = vmul.f32 %v1360, 0.2
      %v1576 = vmul.f32 %v1362, 0.2
      %v1577 = vmul.f32 %v1364, 0.2
      %v1578 = vmul.f32 %v1368, 0.2
      %v1579 = vmul.f32 %v1370, 0.2
      %v1580 = vmul.f32 %v1372, 0.2
      %v1581 = vmul.f32 %v1374, 0.2
      %v1582 = vmul.f32 %v1378, 0.2
      %v1583 = vmul.f32 %v1380, 0.2
      %v1584 = vmul.f32 %v1382, 0.2
      %v1585 = vmul.f32 %v1384, 0.2
      %v1586 = vmul.f32 %v1388, 0.2
      %v1587 = vmul.f32 %v1390, 0.2
      %v1588 = vmul.f32 %v1392, 0.2
      %v1589 = vmul.f32 %v1394, 0.2
      %v1590 = vmul.f32 %v1398, 0.2
      %v1591 = vmul.f32 %v1400, 0.2
      %v1592 = vmul.f32 %v1402, 0.2
      %v1593 = vmul.f32 %v1404, 0.2
      %v1594 = vmul.f32 %v1408, 0.2
      %v1595 = vmul.f32 %v1410, 0.2
      %v1596 = vmul.f32 %v1412, 0.2
      %v1597 = vmul.f32 %v1414, 0.2
      %v1598 = vmul.f32 %v1418, 0.2
      %v1599 = vmul.f32 %v1420, 0.2
      %v1600 = vmul.f32 %v1422, 0.2
      %v1601 = vmul.f32 %v1424, 0.2
      %v1602 = vmul.f32 %v1428, 0.2
      %v1603 = vmul.f32 %v1430, 0.2
      %v1604 = vmul.f32 %v1432, 0.2
      %v1605 = vmul.f32 %v1434, 0.2
      %v1606 = vmul.f32 %v1438, 0.2
      %v1607 = vmul.f32 %v1440, 0.2
      %v1608 = vmul.f32 %v1442, 0.2
      %v1609 = vmul.f32 %v1444, 0.2
      %v1610 = vmul.f32 %v1448, 0.2
      %v1611 = vmul.f32 %v1450, 0.2
      %v1612 = vmul.f32 %v1452, 0.2
      %v1613 = vmul.f32 %v1454, 0.2
      %v1614 = vmul.f32 %v1458, 0.2
      %v1615 = vmul.f32 %v1460, 0.2
      %v1616 = vmul.f32 %v1462, 0.2
      %v1617 = vmul.f32 %v1464, 0.2
      %v1618 = vmul.f32 %v1468, 0.2
      %v1619 = vmul.f32 %v1470, 0.2
      %v1620 = vmul.f32 %v1472, 0.2
      %v1621 = vmul.f32 %v1474, 0.2
      %v1622 = vmul.f32 %v1478, 0.2
      %v1623 = vmul.f32 %v1480, 0.2
      %v1624 = vmul.f32 %v1482, 0.2
      %v1625 = vmul.f32 %v1484, 0.2
      %v1626 = vmul.f32 %v1488, 0.2
      %v1627 = vmul.f32 %v1490, 0.2
      %v1628 = vmul.f32 %v1492, 0.2
      %v1629 = vmul.f32 %v1494, 0.2
      %v1630 = vmul.f32 %v1498, 0.2
      %v1631 = vmul.f32 %v1500, 0.2
      %v1632 = vmul.f32 %v1502, 0.2
      %v1633 = vmul.f32 %v1504, 0.2
      %v1634 = vsel %vm1506, %v1348, %v1570
      %v1635 = vsel %vm1507, %v1350, %v1571
      %v1636 = vsel %vm1508, %v1352, %v1572
      %v1637 = vsel %vm1509, %v1354, %v1573
      %v1638 = vsel %vm1510, %v1358, %v1574
      %v1639 = vsel %vm1511, %v1360, %v1575
      %v1640 = vsel %vm1512, %v1362, %v1576
      %v1641 = vsel %vm1513, %v1364, %v1577
      %v1642 = vsel %vm1514, %v1368, %v1578
      %v1643 = vsel %vm1515, %v1370, %v1579
      %v1644 = vsel %vm1516, %v1372, %v1580
      %v1645 = vsel %vm1517, %v1374, %v1581
      %v1646 = vsel %vm1518, %v1378, %v1582
      %v1647 = vsel %vm1519, %v1380, %v1583
      %v1648 = vsel %vm1520, %v1382, %v1584
      %v1649 = vsel %vm1521, %v1384, %v1585
      %v1650 = vsel %vm1522, %v1388, %v1586
      %v1651 = vsel %vm1523, %v1390, %v1587
      %v1652 = vsel %vm1524, %v1392, %v1588
      %v1653 = vsel %vm1525, %v1394, %v1589
      %v1654 = vsel %vm1526, %v1398, %v1590
      %v1655 = vsel %vm1527, %v1400, %v1591
      %v1656 = vsel %vm1528, %v1402, %v1592
      %v1657 = vsel %vm1529, %v1404, %v1593
      %v1658 = vsel %vm1530, %v1408, %v1594
      %v1659 = vsel %vm1531, %v1410, %v1595
      %v1660 = vsel %vm1532, %v1412, %v1596
      %v1661 = vsel %vm1533, %v1414, %v1597
      %v1662 = vsel %vm1534, %v1418, %v1598
      %v1663 = vsel %vm1535, %v1420, %v1599
      %v1664 = vsel %vm1536, %v1422, %v1600
      %v1665 = vsel %vm1537, %v1424, %v1601
      %v1666 = vsel %vm1538, %v1428, %v1602
      %v1667 = vsel %vm1539, %v1430, %v1603
      %v1668 = vsel %vm1540, %v1432, %v1604
      %v1669 = vsel %vm1541, %v1434, %v1605
      %v1670 = vsel %vm1542, %v1438, %v1606
      %v1671 = vsel %vm1543, %v1440, %v1607
      %v1672 = vsel %vm1544, %v1442, %v1608
      %v1673 = vsel %vm1545, %v1444, %v1609
      %v1674 = vsel %vm1546, %v1448, %v1610
      %v1675 = vsel %vm1547, %v1450, %v1611
      %v1676 = vsel %vm1548, %v1452, %v1612
      %v1677 = vsel %vm1549, %v1454, %v1613
      %v1678 = vsel %vm1550, %v1458, %v1614
      %v1679 = vsel %vm1551, %v1460, %v1615
      %v1680 = vsel %vm1552, %v1462, %v1616
      %v1681 = vsel %vm1553, %v1464, %v1617
      %v1682 = vsel %vm1554, %v1468, %v1618
      %v1683 = vsel %vm1555, %v1470, %v1619
      %v1684 = vsel %vm1556, %v1472, %v1620
      %v1685 = vsel %vm1557, %v1474, %v1621
      %v1686 = vsel %vm1558, %v1478, %v1622
      %v1687 = vsel %vm1559, %v1480, %v1623
      %v1688 = vsel %vm1560, %v1482, %v1624
      %v1689 = vsel %vm1561, %v1484, %v1625
      %v1690 = vsel %vm1562, %v1488, %v1626
      %v1691 = vsel %vm1563, %v1490, %v1627
      %v1692 = vsel %vm1564, %v1492, %v1628
      %v1693 = vsel %vm1565, %v1494, %v1629
      %v1694 = vsel %vm1566, %v1498, %v1630
      %v1695 = vsel %vm1567, %v1500, %v1631
      %v1696 = vsel %vm1568, %v1502, %v1632
      %v1697 = vsel %vm1569, %v1504, %v1633
      %v1698 = vpack.c.bf16 %v1636, %v1634
      %v1699 = vpack.c.bf16 %v1637, %v1635
      %v1700 = vpack.c.bf16 %v1640, %v1638
      %v1701 = vpack.c.bf16 %v1641, %v1639
      %v1702 = vpack.c.bf16 %v1644, %v1642
      %v1703 = vpack.c.bf16 %v1645, %v1643
      %v1704 = vpack.c.bf16 %v1648, %v1646
      %v1705 = vpack.c.bf16 %v1649, %v1647
      %v1706 = vpack.c.bf16 %v1652, %v1650
      %v1707 = vpack.c.bf16 %v1653, %v1651
      %v1708 = vpack.c.bf16 %v1656, %v1654
      %v1709 = vpack.c.bf16 %v1657, %v1655
      %v1710 = vpack.c.bf16 %v1660, %v1658
      %v1711 = vpack.c.bf16 %v1661, %v1659
      %v1712 = vpack.c.bf16 %v1664, %v1662
      %v1713 = vpack.c.bf16 %v1665, %v1663
      %v1714 = vpack.c.bf16 %v1668, %v1666
      %v1715 = vpack.c.bf16 %v1669, %v1667
      %v1716 = vpack.c.bf16 %v1672, %v1670
      %v1717 = vpack.c.bf16 %v1673, %v1671
      %v1718 = vpack.c.bf16 %v1676, %v1674
      %v1719 = vpack.c.bf16 %v1677, %v1675
      %v1720 = vpack.c.bf16 %v1680, %v1678
      %v1721 = vpack.c.bf16 %v1681, %v1679
      %v1722 = vpack.c.bf16 %v1684, %v1682
      %v1723 = vpack.c.bf16 %v1685, %v1683
      %v1724 = vpack.c.bf16 %v1688, %v1686
      %v1725 = vpack.c.bf16 %v1689, %v1687
      %v1726 = vpack.c.bf16 %v1692, %v1690
      %v1727 = vpack.c.bf16 %v1693, %v1691
      %v1728 = vpack.c.bf16 %v1696, %v1694
      %v1729 = vpack.c.bf16 %v1697, %v1695
      %v1730 = vld [vmem:[%s3] sm:$0xf]
      %v1731 = vld [vmem:[%s3 + $0x4] sm:$0xf]
      %v1732 = vld [vmem:[%s3 + $0x8] sm:$0xf]
      %v1733 = vld [vmem:[%s3 + $0xc] sm:$0xf]
      %v1734 = vld [vmem:[%s3 + $0x10] sm:$0xf]
      %v1735 = vld [vmem:[%s3 + $0x14] sm:$0xf]
      %v1736 = vld [vmem:[%s3 + $0x18] sm:$0xf]
      %v1737 = vld [vmem:[%s3 + $0x1c] sm:$0xf]
      %v1738 = vld [vmem:[%s3 + $0x20] sm:$0xf]
      %v1739 = vld [vmem:[%s3 + $0x24] sm:$0xf]
      %v1740 = vld [vmem:[%s3 + $0x28] sm:$0xf]
      %v1741 = vld [vmem:[%s3 + $0x2c] sm:$0xf]
      %v1742 = vld [vmem:[%s3 + $0x30] sm:$0xf]
      %v1743 = vld [vmem:[%s3 + $0x34] sm:$0xf]
      %v1744 = vld [vmem:[%s3 + $0x38] sm:$0xf]
      %v1745 = vld [vmem:[%s3 + $0x3c] sm:$0xf]
      %v1746 = vld [vmem:[%s3 + $0x40] sm:$0xf]
      %v1747 = vld [vmem:[%s3 + $0x44] sm:$0xf]
      %v1748 = vld [vmem:[%s3 + $0x48] sm:$0xf]
      %v1749 = vld [vmem:[%s3 + $0x4c] sm:$0xf]
      %v1750 = vld [vmem:[%s3 + $0x50] sm:$0xf]
      %v1751 = vld [vmem:[%s3 + $0x54] sm:$0xf]
      %v1752 = vld [vmem:[%s3 + $0x58] sm:$0xf]
      %v1753 = vld [vmem:[%s3 + $0x5c] sm:$0xf]
      %v1754 = vld [vmem:[%s3 + $0x60] sm:$0xf]
      %v1755 = vld [vmem:[%s3 + $0x64] sm:$0xf]
      %v1756 = vld [vmem:[%s3 + $0x68] sm:$0xf]
      %v1757 = vld [vmem:[%s3 + $0x6c] sm:$0xf]
      %v1758 = vld [vmem:[%s3 + $0x70] sm:$0xf]
      %v1759 = vld [vmem:[%s3 + $0x74] sm:$0xf]
      %v1760 = vld [vmem:[%s3 + $0x78] sm:$0xf]
      %v1761 = vld [vmem:[%s3 + $0x7c] sm:$0xf]
      %v1762 = vld [vmem:[%s4] sm:$0x1]
      %v1764 = vlaneseq
      %v1765 = vshrl.u32 %v1764, 7
      %v1766 = vsub.s32 0, %v1765
      %v1767 = vrot.slane %v1762, %v1766
      %v1801 = vunpack.c.l.b16 %v1730
      %v1802 = vunpack.c.l.b16 %v1731
      %v1803 = vunpack.c.l.b16 %v1732
      %v1804 = vunpack.c.l.b16 %v1733
      %v1805 = vunpack.c.l.b16 %v1734
      %v1806 = vunpack.c.l.b16 %v1735
      %v1807 = vunpack.c.l.b16 %v1736
      %v1808 = vunpack.c.l.b16 %v1737
      %v1809 = vunpack.c.l.b16 %v1738
      %v1810 = vunpack.c.l.b16 %v1739
      %v1811 = vunpack.c.l.b16 %v1740
      %v1812 = vunpack.c.l.b16 %v1741
      %v1813 = vunpack.c.l.b16 %v1742
      %v1814 = vunpack.c.l.b16 %v1743
      %v1815 = vunpack.c.l.b16 %v1744
      %v1816 = vunpack.c.l.b16 %v1745
      %v1817 = vunpack.c.l.b16 %v1746
      %v1818 = vunpack.c.l.b16 %v1747
      %v1819 = vunpack.c.l.b16 %v1748
      %v1820 = vunpack.c.l.b16 %v1749
      %v1821 = vunpack.c.l.b16 %v1750
      %v1822 = vunpack.c.l.b16 %v1751
      %v1823 = vunpack.c.l.b16 %v1752
      %v1824 = vunpack.c.l.b16 %v1753
      %v1825 = vunpack.c.l.b16 %v1754
      %v1826 = vunpack.c.l.b16 %v1755
      %v1827 = vunpack.c.l.b16 %v1756
      %v1828 = vunpack.c.l.b16 %v1757
      %v1829 = vunpack.c.l.b16 %v1758
      %v1830 = vunpack.c.l.b16 %v1759
      %v1831 = vunpack.c.l.b16 %v1760
      %v1832 = vunpack.c.l.b16 %v1761
      %v1833 = vpack.c.b16 %v1802, %v1801
      %v1834 = vpack.c.b16 %v1804, %v1803
      %v1835 = vpack.c.b16 %v1806, %v1805
      %v1836 = vpack.c.b16 %v1808, %v1807
      %v1837 = vpack.c.b16 %v1810, %v1809
      %v1838 = vpack.c.b16 %v1812, %v1811
      %v1839 = vpack.c.b16 %v1814, %v1813
      %v1840 = vpack.c.b16 %v1816, %v1815
      %v1841 = vpack.c.b16 %v1818, %v1817
      %v1842 = vpack.c.b16 %v1820, %v1819
      %v1843 = vpack.c.b16 %v1822, %v1821
      %v1844 = vpack.c.b16 %v1824, %v1823
      %v1845 = vpack.c.b16 %v1826, %v1825
      %v1846 = vpack.c.b16 %v1828, %v1827
      %v1847 = vpack.c.b16 %v1830, %v1829
      %v1848 = vpack.c.b16 %v1832, %v1831
      %1865 = vmatprep.subr.bf16.mxu0 0
      %1866 = vmatpush1.bf16.msra.mxu0 %v1833
      %1867 = vmatprep.subr.bf16.mxu0 0
      %1868 = vmatpush1.bf16.msra.mxu0 %v1834
      %1869 = vmatprep.subr.bf16.mxu0 0
      %1870 = vmatpush1.bf16.msra.mxu0 %v1835
      %1871 = vmatprep.subr.bf16.mxu0 0
      %1872 = vmatpush1.bf16.msra.mxu0 %v1836
      %1873 = vmatprep.subr.bf16.mxu0 0
      %1874 = vmatpush1.bf16.msra.mxu0 %v1837
      %1875 = vmatprep.subr.bf16.mxu0 0
      %1876 = vmatpush1.bf16.msra.mxu0 %v1838
      %1877 = vmatprep.subr.bf16.mxu0 0
      %1878 = vmatpush1.bf16.msra.mxu0 %v1839
      %1879 = vmatprep.subr.bf16.mxu0 0
      %1880 = vmatpush1.bf16.msra.mxu0 %v1840
      %1881 = vmatprep.subr.bf16.mxu0 0
      %1882 = vmatpush1.bf16.msra.mxu0 %v1841
      %1883 = vmatprep.subr.bf16.mxu0 0
      %1884 = vmatpush1.bf16.msra.mxu0 %v1842
      %1885 = vmatprep.subr.bf16.mxu0 0
      %1886 = vmatpush1.bf16.msra.mxu0 %v1843
      %1887 = vmatprep.subr.bf16.mxu0 0
      %1888 = vmatpush1.bf16.msra.mxu0 %v1844
      %1889 = vmatprep.subr.bf16.mxu0 0
      %1890 = vmatpush1.bf16.msra.mxu0 %v1845
      %1891 = vmatprep.subr.bf16.mxu0 0
      %1892 = vmatpush1.bf16.msra.mxu0 %v1846
      %1893 = vmatprep.subr.bf16.mxu0 0
      %1894 = vmatpush1.bf16.msra.mxu0 %v1847
      %1895 = vmatprep.subr.bf16.mxu0 0
      %1896 = vmatpush1.bf16.msra.mxu0 %v1848
      %1897 = vmatprep.mubr.bf16.mxu0 %v1699
      %1898 = vmatmul.mubr.bf16.gmra.mrb[0].mxu0 %v1698
      %v1899 = vpop.f32.mrb[0].mxu0
      %v1900 = vadd.f32 %v1767, %v1899
      %v1901 = vpop.f32.mrb[0].mxu0
      %v1902 = vpop.f32.mrb[0].mxu0
      %v1903 = vadd.f32 %v1767, %v1902
      %v1904 = vpop.f32.mrb[0].mxu0
      %1905 = vmatprep.mubr.bf16.mxu0 %v1701
      %1906 = vmatmul.mubr.bf16.gmra.mrb[0].mxu0 %v1700
      %v1907 = vpop.f32.mrb[0].mxu0
      %v1908 = vadd.f32 %v1767, %v1907
      %v1909 = vpop.f32.mrb[0].mxu0
      %v1910 = vpop.f32.mrb[0].mxu0
      %v1911 = vadd.f32 %v1767, %v1910
      %v1912 = vpop.f32.mrb[0].mxu0
      %1913 = vmatprep.mubr.bf16.mxu0 %v1703
      %1914 = vmatmul.mubr.bf16.gmra.mrb[0].mxu0 %v1702
      %v1915 = vpop.f32.mrb[0].mxu0
      %v1916 = vadd.f32 %v1767, %v1915
      %v1917 = vpop.f32.mrb[0].mxu0
      %v1918 = vpop.f32.mrb[0].mxu0
      %v1919 = vadd.f32 %v1767, %v1918
      %v1920 = vpop.f32.mrb[0].mxu0
      %1921 = vmatprep.mubr.bf16.mxu0 %v1705
      %1922 = vmatmul.mubr.bf16.gmra.mrb[0].mxu0 %v1704
      %v1923 = vpop.f32.mrb[0].mxu0
      %v1924 = vadd.f32 %v1767, %v1923
      %v1925 = vpop.f32.mrb[0].mxu0
      %v1926 = vpop.f32.mrb[0].mxu0
      %v1927 = vadd.f32 %v1767, %v1926
      %v1928 = vpop.f32.mrb[0].mxu0
      %1929 = vmatprep.mubr.bf16.mxu0 %v1707
      %1930 = vmatmul.mubr.bf16.gmra.mrb[0].mxu0 %v1706
      %v1931 = vpop.f32.mrb[0].mxu0
      %v1932 = vadd.f32 %v1767, %v1931
      %v1933 = vpop.f32.mrb[0].mxu0
      %v1934 = vpop.f32.mrb[0].mxu0
      %v1935 = vadd.f32 %v1767, %v1934
      %v1936 = vpop.f32.mrb[0].mxu0
      %1937 = vmatprep.mubr.bf16.mxu0 %v1709
      %1938 = vmatmul.mubr.bf16.gmra.mrb[0].mxu0 %v1708
      %v1939 = vpop.f32.mrb[0].mxu0
      %v1940 = vadd.f32 %v1767, %v1939
      %v1941 = vpop.f32.mrb[0].mxu0
      %v1942 = vpop.f32.mrb[0].mxu0
      %v1943 = vadd.f32 %v1767, %v1942
      %v1944 = vpop.f32.mrb[0].mxu0
      %1945 = vmatprep.mubr.bf16.mxu0 %v1711
      %1946 = vmatmul.mubr.bf16.gmra.mrb[0].mxu0 %v1710
      %v1947 = vpop.f32.mrb[0].mxu0
      %v1948 = vadd.f32 %v1767, %v1947
      %v1949 = vpop.f32.mrb[0].mxu0
      %v1950 = vpop.f32.mrb[0].mxu0
      %v1951 = vadd.f32 %v1767, %v1950
      %v1952 = vpop.f32.mrb[0].mxu0
      %1953 = vmatprep.mubr.bf16.mxu0 %v1713
      %1954 = vmatmul.mubr.bf16.gmra.mrb[0].mxu0 %v1712
      %v1955 = vpop.f32.mrb[0].mxu0
      %v1956 = vadd.f32 %v1767, %v1955
      %v1957 = vpop.f32.mrb[0].mxu0
      %v1958 = vpop.f32.mrb[0].mxu0
      %v1959 = vadd.f32 %v1767, %v1958
      %v1960 = vpop.f32.mrb[0].mxu0
      %1961 = vmatprep.mubr.bf16.mxu0 %v1715
      %1962 = vmatmul.mubr.bf16.gmra.mrb[0].mxu0 %v1714
      %v1963 = vpop.f32.mrb[0].mxu0
      %v1964 = vadd.f32 %v1767, %v1963
      %v1965 = vpop.f32.mrb[0].mxu0
      %v1966 = vpop.f32.mrb[0].mxu0
      %v1967 = vadd.f32 %v1767, %v1966
      %v1968 = vpop.f32.mrb[0].mxu0
      %1969 = vmatprep.mubr.bf16.mxu0 %v1717
      %1970 = vmatmul.mubr.bf16.gmra.mrb[0].mxu0 %v1716
      %v1971 = vpop.f32.mrb[0].mxu0
      %v1972 = vadd.f32 %v1767, %v1971
      %v1973 = vpop.f32.mrb[0].mxu0
      %v1974 = vpop.f32.mrb[0].mxu0
      %v1975 = vadd.f32 %v1767, %v1974
      %v1976 = vpop.f32.mrb[0].mxu0
      %1977 = vmatprep.mubr.bf16.mxu0 %v1719
      %1978 = vmatmul.mubr.bf16.gmra.mrb[0].mxu0 %v1718
      %v1979 = vpop.f32.mrb[0].mxu0
      %v1980 = vadd.f32 %v1767, %v1979
      %v1981 = vpop.f32.mrb[0].mxu0
      %v1982 = vpop.f32.mrb[0].mxu0
      %v1983 = vadd.f32 %v1767, %v1982
      %v1984 = vpop.f32.mrb[0].mxu0
      %1985 = vmatprep.mubr.bf16.mxu0 %v1721
      %1986 = vmatmul.mubr.bf16.gmra.mrb[0].mxu0 %v1720
      %v1987 = vpop.f32.mrb[0].mxu0
      %v1988 = vadd.f32 %v1767, %v1987
      %v1989 = vpop.f32.mrb[0].mxu0
      %v1990 = vpop.f32.mrb[0].mxu0
      %v1991 = vadd.f32 %v1767, %v1990
      %v1992 = vpop.f32.mrb[0].mxu0
      %1993 = vmatprep.mubr.bf16.mxu0 %v1723
      %1994 = vmatmul.mubr.bf16.gmra.mrb[0].mxu0 %v1722
      %v1995 = vpop.f32.mrb[0].mxu0
      %v1996 = vadd.f32 %v1767, %v1995
      %v1997 = vpop.f32.mrb[0].mxu0
      %v1998 = vpop.f32.mrb[0].mxu0
      %v1999 = vadd.f32 %v1767, %v1998
      %v2000 = vpop.f32.mrb[0].mxu0
      %2001 = vmatprep.mubr.bf16.mxu0 %v1725
      %2002 = vmatmul.mubr.bf16.gmra.mrb[0].mxu0 %v1724
      %v2003 = vpop.f32.mrb[0].mxu0
      %v2004 = vadd.f32 %v1767, %v2003
      %v2005 = vpop.f32.mrb[0].mxu0
      %v2006 = vpop.f32.mrb[0].mxu0
      %v2007 = vadd.f32 %v1767, %v2006
      %v2008 = vpop.f32.mrb[0].mxu0
      %2009 = vmatprep.mubr.bf16.mxu0 %v1727
      %2010 = vmatmul.mubr.bf16.gmra.mrb[0].mxu0 %v1726
      %v2011 = vpop.f32.mrb[0].mxu0
      %v2012 = vadd.f32 %v1767, %v2011
      %v2013 = vpop.f32.mrb[0].mxu0
      %v2014 = vpop.f32.mrb[0].mxu0
      %v2015 = vadd.f32 %v1767, %v2014
      %v2016 = vpop.f32.mrb[0].mxu0
      %2017 = vmatprep.mubr.bf16.mxu0 %v1729
      %2018 = vmatmul.mubr.bf16.gmra.mrb[0].mxu0 %v1728
      %v2019 = vpop.f32.mrb[0].mxu0
      %v2020 = vadd.f32 %v1767, %v2019
      %v2021 = vpop.f32.mrb[0].mxu0
      %v2022 = vpop.f32.mrb[0].mxu0
      %v2023 = vadd.f32 %v1767, %v2022
      %v2024 = vpop.f32.mrb[0].mxu0
      %2025 = vdwg.mxu0
      %vm2026 = vcmp.ge.f32.partialorder %v1900, 0.0
      %vm2027 = vcmp.ge.f32.partialorder %v1903, 0.0
      %vm2028 = vcmp.ge.f32.partialorder %v1908, 0.0
      %vm2029 = vcmp.ge.f32.partialorder %v1911, 0.0
      %vm2030 = vcmp.ge.f32.partialorder %v1916, 0.0
      %vm2031 = vcmp.ge.f32.partialorder %v1919, 0.0
      %vm2032 = vcmp.ge.f32.partialorder %v1924, 0.0
      %vm2033 = vcmp.ge.f32.partialorder %v1927, 0.0
      %vm2034 = vcmp.ge.f32.partialorder %v1932, 0.0
      %vm2035 = vcmp.ge.f32.partialorder %v1935, 0.0
      %vm2036 = vcmp.ge.f32.partialorder %v1940, 0.0
      %vm2037 = vcmp.ge.f32.partialorder %v1943, 0.0
      %vm2038 = vcmp.ge.f32.partialorder %v1948, 0.0
      %vm2039 = vcmp.ge.f32.partialorder %v1951, 0.0
      %vm2040 = vcmp.ge.f32.partialorder %v1956, 0.0
      %vm2041 = vcmp.ge.f32.partialorder %v1959, 0.0
      %vm2042 = vcmp.ge.f32.partialorder %v1964, 0.0
      %vm2043 = vcmp.ge.f32.partialorder %v1967, 0.0
      %vm2044 = vcmp.ge.f32.partialorder %v1972, 0.0
      %vm2045 = vcmp.ge.f32.partialorder %v1975, 0.0
      %vm2046 = vcmp.ge.f32.partialorder %v1980, 0.0
      %vm2047 = vcmp.ge.f32.partialorder %v1983, 0.0
      %vm2048 = vcmp.ge.f32.partialorder %v1988, 0.0
      %vm2049 = vcmp.ge.f32.partialorder %v1991, 0.0
      %vm2050 = vcmp.ge.f32.partialorder %v1996, 0.0
      %vm2051 = vcmp.ge.f32.partialorder %v1999, 0.0
      %vm2052 = vcmp.ge.f32.partialorder %v2004, 0.0
      %vm2053 = vcmp.ge.f32.partialorder %v2007, 0.0
      %vm2054 = vcmp.ge.f32.partialorder %v2012, 0.0
      %vm2055 = vcmp.ge.f32.partialorder %v2015, 0.0
      %vm2056 = vcmp.ge.f32.partialorder %v2020, 0.0
      %vm2057 = vcmp.ge.f32.partialorder %v2023, 0.0
      %v2058 = vmul.f32 %v1900, 0.2
      %v2059 = vmul.f32 %v1903, 0.2
      %v2060 = vmul.f32 %v1908, 0.2
      %v2061 = vmul.f32 %v1911, 0.2
      %v2062 = vmul.f32 %v1916, 0.2
      %v2063 = vmul.f32 %v1919, 0.2
      %v2064 = vmul.f32 %v1924, 0.2
      %v2065 = vmul.f32 %v1927, 0.2
      %v2066 = vmul.f32 %v1932, 0.2
      %v2067 = vmul.f32 %v1935, 0.2
      %v2068 = vmul.f32 %v1940, 0.2
      %v2069 = vmul.f32 %v1943, 0.2
      %v2070 = vmul.f32 %v1948, 0.2
      %v2071 = vmul.f32 %v1951, 0.2
      %v2072 = vmul.f32 %v1956, 0.2
      %v2073 = vmul.f32 %v1959, 0.2
      %v2074 = vmul.f32 %v1964, 0.2
      %v2075 = vmul.f32 %v1967, 0.2
      %v2076 = vmul.f32 %v1972, 0.2
      %v2077 = vmul.f32 %v1975, 0.2
      %v2078 = vmul.f32 %v1980, 0.2
      %v2079 = vmul.f32 %v1983, 0.2
      %v2080 = vmul.f32 %v1988, 0.2
      %v2081 = vmul.f32 %v1991, 0.2
      %v2082 = vmul.f32 %v1996, 0.2
      %v2083 = vmul.f32 %v1999, 0.2
      %v2084 = vmul.f32 %v2004, 0.2
      %v2085 = vmul.f32 %v2007, 0.2
      %v2086 = vmul.f32 %v2012, 0.2
      %v2087 = vmul.f32 %v2015, 0.2
      %v2088 = vmul.f32 %v2020, 0.2
      %v2089 = vmul.f32 %v2023, 0.2
      %v2090 = vsel %vm2026, %v1900, %v2058
      %v2091 = vsel %vm2027, %v1903, %v2059
      %v2092 = vsel %vm2028, %v1908, %v2060
      %v2093 = vsel %vm2029, %v1911, %v2061
      %v2094 = vsel %vm2030, %v1916, %v2062
      %v2095 = vsel %vm2031, %v1919, %v2063
      %v2096 = vsel %vm2032, %v1924, %v2064
      %v2097 = vsel %vm2033, %v1927, %v2065
      %v2098 = vsel %vm2034, %v1932, %v2066
      %v2099 = vsel %vm2035, %v1935, %v2067
      %v2100 = vsel %vm2036, %v1940, %v2068
      %v2101 = vsel %vm2037, %v1943, %v2069
      %v2102 = vsel %vm2038, %v1948, %v2070
      %v2103 = vsel %vm2039, %v1951, %v2071
      %v2104 = vsel %vm2040, %v1956, %v2072
      %v2105 = vsel %vm2041, %v1959, %v2073
      %v2106 = vsel %vm2042, %v1964, %v2074
      %v2107 = vsel %vm2043, %v1967, %v2075
      %v2108 = vsel %vm2044, %v1972, %v2076
      %v2109 = vsel %vm2045, %v1975, %v2077
      %v2110 = vsel %vm2046, %v1980, %v2078
      %v2111 = vsel %vm2047, %v1983, %v2079
      %v2112 = vsel %vm2048, %v1988, %v2080
      %v2113 = vsel %vm2049, %v1991, %v2081
      %v2114 = vsel %vm2050, %v1996, %v2082
      %v2115 = vsel %vm2051, %v1999, %v2083
      %v2116 = vsel %vm2052, %v2004, %v2084
      %v2117 = vsel %vm2053, %v2007, %v2085
      %v2118 = vsel %vm2054, %v2012, %v2086
      %v2119 = vsel %vm2055, %v2015, %v2087
      %v2120 = vsel %vm2056, %v2020, %v2088
      %v2121 = vsel %vm2057, %v2023, %v2089
      %2122 = vxpose.xlu0.b32.start [1/16] %v2090, 128
      %2123 = vxpose.xlu0.b32.cont [2/16] %v2091, 128
      %2124 = vxpose.xlu0.b32.cont [3/16] %v2092, 128
      %2125 = vxpose.xlu0.b32.cont [4/16] %v2093, 128
      %2126 = vxpose.xlu0.b32.cont [5/16] %v2094, 128
      %2127 = vxpose.xlu0.b32.cont [6/16] %v2095, 128
      %2128 = vxpose.xlu0.b32.cont [7/16] %v2096, 128
      %2129 = vxpose.xlu0.b32.cont [8/16] %v2097, 128
      %2130 = vxpose.xlu0.b32.cont [9/16] %v2098, 128
      %2131 = vxpose.xlu0.b32.cont [10/16] %v2099, 128
      %2132 = vxpose.xlu0.b32.cont [11/16] %v2100, 128
      %2133 = vxpose.xlu0.b32.cont [12/16] %v2101, 128
      %2134 = vxpose.xlu0.b32.cont [13/16] %v2102, 128
      %2135 = vxpose.xlu0.b32.cont [14/16] %v2103, 128
      %2136 = vxpose.xlu0.b32.cont [15/16] %v2104, 128
      %2137 = vxpose.xlu0.b32.end [16/16] %v2105, 128
      %v2138 = vpop.trf.xlu0
      %v2139 = vpop.trf.xlu0
      %v2140 = vpop.trf.xlu0
      %v2141 = vpop.trf.xlu0
      %v2142 = vpop.trf.xlu0
      %v2143 = vpop.trf.xlu0
      %v2144 = vpop.trf.xlu0
      %v2145 = vpop.trf.xlu0
      %v2146 = vpop.trf.xlu0
      %v2147 = vpop.trf.xlu0
      %v2148 = vpop.trf.xlu0
      %v2149 = vpop.trf.xlu0
      %v2150 = vpop.trf.xlu0
      %v2151 = vpop.trf.xlu0
      %v2152 = vpop.trf.xlu0
      %v2153 = vpop.trf.xlu0
      %2154 = vxpose.xlu0.b32.start [1/16] %v2106, 128
      %2155 = vxpose.xlu0.b32.cont [2/16] %v2107, 128
      %2156 = vxpose.xlu0.b32.cont [3/16] %v2108, 128
      %2157 = vxpose.xlu0.b32.cont [4/16] %v2109, 128
      %2158 = vxpose.xlu0.b32.cont [5/16] %v2110, 128
      %2159 = vxpose.xlu0.b32.cont [6/16] %v2111, 128
      %2160 = vxpose.xlu0.b32.cont [7/16] %v2112, 128
      %2161 = vxpose.xlu0.b32.cont [8/16] %v2113, 128
      %2162 = vxpose.xlu0.b32.cont [9/16] %v2114, 128
      %2163 = vxpose.xlu0.b32.cont [10/16] %v2115, 128
      %2164 = vxpose.xlu0.b32.cont [11/16] %v2116, 128
      %2165 = vxpose.xlu0.b32.cont [12/16] %v2117, 128
      %2166 = vxpose.xlu0.b32.cont [13/16] %v2118, 128
      %2167 = vxpose.xlu0.b32.cont [14/16] %v2119, 128
      %2168 = vxpose.xlu0.b32.cont [15/16] %v2120, 128
      %2169 = vxpose.xlu0.b32.end [16/16] %v2121, 128
      %v2170 = vpop.trf.xlu0
      %v2171 = vpop.trf.xlu0
      %v2172 = vpop.trf.xlu0
      %v2173 = vpop.trf.xlu0
      %v2174 = vpop.trf.xlu0
      %v2175 = vpop.trf.xlu0
      %v2176 = vpop.trf.xlu0
      %v2177 = vpop.trf.xlu0
      %v2178 = vpop.trf.xlu0
      %v2179 = vpop.trf.xlu0
      %v2180 = vpop.trf.xlu0
      %v2181 = vpop.trf.xlu0
      %v2182 = vpop.trf.xlu0
      %v2183 = vpop.trf.xlu0
      %v2184 = vpop.trf.xlu0
      %v2185 = vpop.trf.xlu0
      %v2186 = vpack.c.bf16 %v2139, %v2138
      %v2187 = vpack.c.bf16 %v2171, %v2170
      %v2188 = vpack.c.bf16 %v2141, %v2140
      %v2189 = vpack.c.bf16 %v2173, %v2172
      %v2190 = vpack.c.bf16 %v2143, %v2142
      %v2191 = vpack.c.bf16 %v2175, %v2174
      %v2192 = vpack.c.bf16 %v2145, %v2144
      %v2193 = vpack.c.bf16 %v2177, %v2176
      %v2194 = vpack.c.bf16 %v2147, %v2146
      %v2195 = vpack.c.bf16 %v2179, %v2178
      %v2196 = vpack.c.bf16 %v2149, %v2148
      %v2197 = vpack.c.bf16 %v2181, %v2180
      %v2198 = vpack.c.bf16 %v2151, %v2150
      %v2199 = vpack.c.bf16 %v2183, %v2182
      %v2200 = vpack.c.bf16 %v2153, %v2152
      %v2201 = vpack.c.bf16 %v2185, %v2184
      %v2202 = vld [vmem:[%s5] sm:$0xf]
      %v2203 = vld [vmem:[%s5 + $0x4] sm:$0xf]
      %v2204 = vld [vmem:[%s5 + $0x8] sm:$0xf]
      %v2205 = vld [vmem:[%s5 + $0xc] sm:$0xf]
      %v2206 = vld [vmem:[%s5 + $0x10] sm:$0xf]
      %v2207 = vld [vmem:[%s5 + $0x14] sm:$0xf]
      %v2208 = vld [vmem:[%s5 + $0x18] sm:$0xf]
      %v2209 = vld [vmem:[%s5 + $0x1c] sm:$0xf]
      %v2210 = vld [vmem:[%s6] sm:$0xff]
      %v2211 = vld [vmem:[%s6 + $0x8] sm:$0xff]
      %v2212 = vld [vmem:[%s6 + $0x10] sm:$0xff]
      %v2213 = vld [vmem:[%s6 + $0x18] sm:$0xff]
      %v2214 = vld [vmem:[%s6 + $0x20] sm:$0xff]
      %v2215 = vld [vmem:[%s6 + $0x28] sm:$0xff]
      %v2216 = vld [vmem:[%s6 + $0x30] sm:$0xff]
      %v2217 = vld [vmem:[%s6 + $0x38] sm:$0xff]
      %2219 = vset.pattern.permute.xlu0 0
      %2220 = vperm.xlu0 %2219, %v2210
      %v2221 = vpop.permute.xlu0 %2220
      %2224 = vset.pattern.permute.xlu0 0
      %2225 = vperm.xlu0 %2224, %v2211
      %v2226 = vpop.permute.xlu0 %2225
      %2229 = vset.pattern.permute.xlu0 0
      %2230 = vperm.xlu0 %2229, %v2212
      %v2231 = vpop.permute.xlu0 %2230
      %2234 = vset.pattern.permute.xlu0 0
      %2235 = vperm.xlu0 %2234, %v2213
      %v2236 = vpop.permute.xlu0 %2235
      %2239 = vset.pattern.permute.xlu0 0
      %2240 = vperm.xlu0 %2239, %v2214
      %v2241 = vpop.permute.xlu0 %2240
      %2244 = vset.pattern.permute.xlu0 0
      %2245 = vperm.xlu0 %2244, %v2215
      %v2246 = vpop.permute.xlu0 %2245
      %2249 = vset.pattern.permute.xlu0 0
      %2250 = vperm.xlu0 %2249, %v2216
      %v2251 = vpop.permute.xlu0 %2250
      %2254 = vset.pattern.permute.xlu0 0
      %2255 = vperm.xlu0 %2254, %v2217
      %v2256 = vpop.permute.xlu0 %2255
      %v2266 = vunpack.c.l.b16 %v2202
      %v2267 = vunpack.c.l.b16 %v2203
      %v2268 = vunpack.c.l.b16 %v2204
      %v2269 = vunpack.c.l.b16 %v2205
      %v2270 = vunpack.c.l.b16 %v2206
      %v2271 = vunpack.c.l.b16 %v2207
      %v2272 = vunpack.c.l.b16 %v2208
      %v2273 = vunpack.c.l.b16 %v2209
      %v2274 = vpack.c.b16 %v2267, %v2266
      %v2275 = vpack.c.b16 %v2269, %v2268
      %v2276 = vpack.c.b16 %v2271, %v2270
      %v2277 = vpack.c.b16 %v2273, %v2272
      %2282 = vmatprep.subr.bf16.mxu0 %v2187
      %2283 = vmatpush1.bf16.msra.mxu0 %v2186
      %2284 = vmatprep.subr.bf16.mxu0 %v2189
      %2285 = vmatpush1.bf16.msra.mxu0 %v2188
      %2286 = vmatprep.subr.bf16.mxu0 %v2191
      %2287 = vmatpush1.bf16.msra.mxu0 %v2190
      %2288 = vmatprep.subr.bf16.mxu0 %v2193
      %2289 = vmatpush1.bf16.msra.mxu0 %v2192
      %2290 = vmatprep.subr.bf16.mxu0 %v2195
      %2291 = vmatpush1.bf16.msra.mxu0 %v2194
      %2292 = vmatprep.subr.bf16.mxu0 %v2197
      %2293 = vmatpush1.bf16.msra.mxu0 %v2196
      %2294 = vmatprep.subr.bf16.mxu0 %v2199
      %2295 = vmatpush1.bf16.msra.mxu0 %v2198
      %2296 = vmatprep.subr.bf16.mxu0 %v2201
      %2297 = vmatpush1.bf16.msra.mxu0 %v2200
      %2298 = vmatprep.subr.bf16.mxu0 0
      %2299 = vmatpush1.bf16.msra.mxu0 0
      %2300 = vmatprep.subr.bf16.mxu0 0
      %2301 = vmatpush1.bf16.msra.mxu0 0
      %2302 = vmatprep.subr.bf16.mxu0 0
      %2303 = vmatpush1.bf16.msra.mxu0 0
      %2304 = vmatprep.subr.bf16.mxu0 0
      %2305 = vmatpush1.bf16.msra.mxu0 0
      %2306 = vmatprep.subr.bf16.mxu0 0
      %2307 = vmatpush1.bf16.msra.mxu0 0
      %2308 = vmatprep.subr.bf16.mxu0 0
      %2309 = vmatpush1.bf16.msra.mxu0 0
      %2310 = vmatprep.subr.bf16.mxu0 0
      %2311 = vmatpush1.bf16.msra.mxu0 0
      %2312 = vmatprep.subr.bf16.mxu0 0
      %2313 = vmatpush1.bf16.msra.mxu0 0
      %2314 = vmatprep.mubr.bf16.mxu0 0
      %2315 = vmatmul.mubr.bf16.gmra.mrb[0].mxu0 %v2274
      %v2316 = vpop.f32.mrb[0].mxu0
      %v2317 = vadd.f32 %v2221, %v2316
      %v2318 = vpop.f32.mrb[0].mxu0
      %v2319 = vadd.f32 %v2221, %v2318
      %v2320 = vpop.f32.mrb[0].mxu0
      %v2321 = vadd.f32 %v2226, %v2320
      %v2322 = vpop.f32.mrb[0].mxu0
      %v2323 = vadd.f32 %v2226, %v2322
      %2324 = vmatprep.mubr.bf16.mxu0 0
      %2325 = vmatmul.mubr.bf16.gmra.mrb[0].mxu0 %v2275
      %v2326 = vpop.f32.mrb[0].mxu0
      %v2327 = vadd.f32 %v2231, %v2326
      %v2328 = vpop.f32.mrb[0].mxu0
      %v2329 = vadd.f32 %v2231, %v2328
      %v2330 = vpop.f32.mrb[0].mxu0
      %v2331 = vadd.f32 %v2236, %v2330
      %v2332 = vpop.f32.mrb[0].mxu0
      %v2333 = vadd.f32 %v2236, %v2332
      %2334 = vmatprep.mubr.bf16.mxu0 0
      %2335 = vmatmul.mubr.bf16.gmra.mrb[0].mxu0 %v2276
      %v2336 = vpop.f32.mrb[0].mxu0
      %v2337 = vadd.f32 %v2241, %v2336
      %v2338 = vpop.f32.mrb[0].mxu0
      %v2339 = vadd.f32 %v2241, %v2338
      %v2340 = vpop.f32.mrb[0].mxu0
      %v2341 = vadd.f32 %v2246, %v2340
      %v2342 = vpop.f32.mrb[0].mxu0
      %v2343 = vadd.f32 %v2246, %v2342
      %2344 = vmatprep.mubr.bf16.mxu0 0
      %2345 = vmatmul.mubr.bf16.gmra.mrb[0].mxu0 %v2277
      %v2346 = vpop.f32.mrb[0].mxu0
      %v2347 = vadd.f32 %v2251, %v2346
      %v2348 = vpop.f32.mrb[0].mxu0
      %v2349 = vadd.f32 %v2251, %v2348
      %v2350 = vpop.f32.mrb[0].mxu0
      %v2351 = vadd.f32 %v2256, %v2350
      %v2352 = vpop.f32.mrb[0].mxu0
      %v2353 = vadd.f32 %v2256, %v2352
      %2354 = vdwg.mxu0
      %vm2355 = vcmp.ge.f32.partialorder %v2317, 0.0
      %vm2356 = vcmp.ge.f32.partialorder %v2319, 0.0
      %vm2357 = vcmp.ge.f32.partialorder %v2321, 0.0
      %vm2358 = vcmp.ge.f32.partialorder %v2323, 0.0
      %vm2359 = vcmp.ge.f32.partialorder %v2327, 0.0
      %vm2360 = vcmp.ge.f32.partialorder %v2329, 0.0
      %vm2361 = vcmp.ge.f32.partialorder %v2331, 0.0
      %vm2362 = vcmp.ge.f32.partialorder %v2333, 0.0
      %vm2363 = vcmp.ge.f32.partialorder %v2337, 0.0
      %vm2364 = vcmp.ge.f32.partialorder %v2339, 0.0
      %vm2365 = vcmp.ge.f32.partialorder %v2341, 0.0
      %vm2366 = vcmp.ge.f32.partialorder %v2343, 0.0
      %vm2367 = vcmp.ge.f32.partialorder %v2347, 0.0
      %vm2368 = vcmp.ge.f32.partialorder %v2349, 0.0
      %vm2369 = vcmp.ge.f32.partialorder %v2351, 0.0
      %vm2370 = vcmp.ge.f32.partialorder %v2353, 0.0
      %v2371 = vmul.f32 %v2317, 0.2
      %v2372 = vmul.f32 %v2319, 0.2
      %v2373 = vmul.f32 %v2321, 0.2
      %v2374 = vmul.f32 %v2323, 0.2
      %v2375 = vmul.f32 %v2327, 0.2
      %v2376 = vmul.f32 %v2329, 0.2
      %v2377 = vmul.f32 %v2331, 0.2
      %v2378 = vmul.f32 %v2333, 0.2
      %v2379 = vmul.f32 %v2337, 0.2
      %v2380 = vmul.f32 %v2339, 0.2
      %v2381 = vmul.f32 %v2341, 0.2
      %v2382 = vmul.f32 %v2343, 0.2
      %v2383 = vmul.f32 %v2347, 0.2
      %v2384 = vmul.f32 %v2349, 0.2
      %v2385 = vmul.f32 %v2351, 0.2
      %v2386 = vmul.f32 %v2353, 0.2
      %v2387 = vsel %vm2355, %v2317, %v2371
      %v2388 = vsel %vm2356, %v2319, %v2372
      %v2389 = vsel %vm2357, %v2321, %v2373
      %v2390 = vsel %vm2358, %v2323, %v2374
      %v2391 = vsel %vm2359, %v2327, %v2375
      %v2392 = vsel %vm2360, %v2329, %v2376
      %v2393 = vsel %vm2361, %v2331, %v2377
      %v2394 = vsel %vm2362, %v2333, %v2378
      %v2395 = vsel %vm2363, %v2337, %v2379
      %v2396 = vsel %vm2364, %v2339, %v2380
      %v2397 = vsel %vm2365, %v2341, %v2381
      %v2398 = vsel %vm2366, %v2343, %v2382
      %v2399 = vsel %vm2367, %v2347, %v2383
      %v2400 = vsel %vm2368, %v2349, %v2384
      %v2401 = vsel %vm2369, %v2351, %v2385
      %v2402 = vsel %vm2370, %v2353, %v2386
      %v2403 = vld [vmem:[%s7] sm:$0xff]
      %v2404 = vld [vmem:[%s7 + $0x8] sm:$0xff]
      %v2405 = vld [vmem:[%s7 + $0x10] sm:$0xff]
      %v2406 = vld [vmem:[%s7 + $0x18] sm:$0xff]
      %v2407 = vld [vmem:[%s7 + $0x20] sm:$0xff]
      %v2408 = vld [vmem:[%s7 + $0x28] sm:$0xff]
      %v2409 = vld [vmem:[%s7 + $0x30] sm:$0xff]
      %v2410 = vld [vmem:[%s7 + $0x38] sm:$0xff]
      %2412 = vset.pattern.permute.xlu0 0
      %2413 = vperm.xlu0 %2412, %v2403
      %v2414 = vpop.permute.xlu0 %2413
      %2417 = vset.pattern.permute.xlu0 0
      %2418 = vperm.xlu0 %2417, %v2404
      %v2419 = vpop.permute.xlu0 %2418
      %2422 = vset.pattern.permute.xlu0 0
      %2423 = vperm.xlu0 %2422, %v2405
      %v2424 = vpop.permute.xlu0 %2423
      %2427 = vset.pattern.permute.xlu0 0
      %2428 = vperm.xlu0 %2427, %v2406
      %v2429 = vpop.permute.xlu0 %2428
      %2432 = vset.pattern.permute.xlu0 0
      %2433 = vperm.xlu0 %2432, %v2407
      %v2434 = vpop.permute.xlu0 %2433
      %2437 = vset.pattern.permute.xlu0 0
      %2438 = vperm.xlu0 %2437, %v2408
      %v2439 = vpop.permute.xlu0 %2438
      %2442 = vset.pattern.permute.xlu0 0
      %2443 = vperm.xlu0 %2442, %v2409
      %v2444 = vpop.permute.xlu0 %2443
      %2447 = vset.pattern.permute.xlu0 0
      %2448 = vperm.xlu0 %2447, %v2410
      %v2449 = vpop.permute.xlu0 %2448
      %v2451 = vmul.f32 %v2387, %v2414
      %v2452 = vmul.f32 %v2388, %v2414
      %v2453 = vmul.f32 %v2389, %v2419
      %v2454 = vmul.f32 %v2390, %v2419
      %v2455 = vmul.f32 %v2391, %v2424
      %v2456 = vmul.f32 %v2392, %v2424
      %v2457 = vmul.f32 %v2393, %v2429
      %v2458 = vmul.f32 %v2394, %v2429
      %v2459 = vmul.f32 %v2395, %v2434
      %v2460 = vmul.f32 %v2396, %v2434
      %v2461 = vmul.f32 %v2397, %v2439
      %v2462 = vmul.f32 %v2398, %v2439
      %v2463 = vmul.f32 %v2399, %v2444
      %v2464 = vmul.f32 %v2400, %v2444
      %v2465 = vmul.f32 %v2401, %v2449
      %v2466 = vmul.f32 %v2402, %v2449
      %v2467 = vadd.f32 %v2451, %v2453
      %v2468 = vadd.f32 %v2467, %v2455
      %v2469 = vadd.f32 %v2468, %v2457
      %v2470 = vadd.f32 %v2469, %v2459
      %v2471 = vadd.f32 %v2470, %v2461
      %v2472 = vadd.f32 %v2471, %v2463
      %v2473 = vadd.f32 %v2472, %v2465
      %v2474 = vrot.slane %v2473, 4
      %v2475 = vadd.f32 %v2473, %v2474
      %v2476 = vrot.slane %v2475, 2
      %v2477 = vadd.f32 %v2475, %v2476
      %v2478 = vrot.slane %v2477, 1
      %v2479 = vadd.f32 %v2477, %v2478
      %v2480 = vadd.f32 %v2452, %v2454
      %v2481 = vadd.f32 %v2480, %v2456
      %v2482 = vadd.f32 %v2481, %v2458
      %v2483 = vadd.f32 %v2482, %v2460
      %v2484 = vadd.f32 %v2483, %v2462
      %v2485 = vadd.f32 %v2484, %v2464
      %v2486 = vadd.f32 %v2485, %v2466
      %v2487 = vrot.slane %v2486, 4
      %v2488 = vadd.f32 %v2486, %v2487
      %v2489 = vrot.slane %v2488, 2
      %v2490 = vadd.f32 %v2488, %v2489
      %v2491 = vrot.slane %v2490, 1
      %v2492 = vadd.f32 %v2490, %v2491
      %v2493 = vld [vmem:[#allocation2] sm:$0x1]
      %2495 = vset.pattern.permute.xlu0 0
      %2496 = vperm.xlu0 %2495, %v2493
      %v2497 = vpop.permute.xlu0 %2496
      %v2499 = vlaneseq
      %v2500 = vshrl.u32 %v2499, 7
      %v2501 = vsub.s32 0, %v2500
      %v2502 = vrot.slane %v2497, %v2501
      %v2503 = vadd.f32 %v2479, %v2502
      %v2504 = vadd.f32 %v2492, %v2502
      %v2505 = vxor.u32 %v2503, 2147483648
      %v2506 = vxor.u32 %v2504, 2147483648
      %v2507 = vmul.f32 %v2505, 1.442695
      %v2508 = vpow.pop %v2507
      %v2509 = vmul.f32 %v2506, 1.442695
      %v2510 = vpow.pop %v2509
      %v2511 = vadd.f32 %v2508, 1.0
      %v2512 = vadd.f32 %v2510, 1.0
      %v2513 = vrcp.pop %v2511
      %v2514 = vmul.f32 1.0, %v2513
      %v2515 = vrcp.pop %v2512
      %v2516 = vmul.f32 1.0, %v2515
      %v2519 = vcombine.low %v2514, %v2516
      %v2521 = vunpack.c.l.s4 1966171168
      %v2522 = vunpack.c.0.s8 %v2521
      %v2523 = vlaneseq
      %v2524 = vshrl.u32 %v2523, 7
      %v2525 = vsub.s32 %v2522, %v2524
      %v2526 = vrot.slane %v2519, %v2525
      %v2528 = vunpack.c.l.s4 1966171168
      %v2529 = vunpack.c.0.s8 %v2528
      %v2530 = vlaneseq
      %v2531 = vshrl.u32 %v2530, 7
      %v2532 = vsub.s32 %v2529, %v2531
      %v2533 = vrot.slane %v2526, %v2532
      %v2535 = vlaneseq
      %vm2536 = vcmp.ge.s32.totalorder %v2535, 0
      %vm2537 = vcmp.lt.s32.totalorder %v2535, 256
      %vm2538 = vmand %vm2536, %vm2537
      %2539 = vst.msk [vmem:[%s337] sm:$0x3] %vm2538, %v2533
      %s2540 = smul.u32 2, %s22
      %p2541 = scmp.lt.s32.totalorder %s2540, 3
      %s2542 = scalar_select %p2541, %s2540, 3
      %s2543 = scalar_lea.vmem %s9, %s2542
      // Predicated region
      $region57: #{discriminator_forward.1} parent=55 // pred_check
        %p2544 = pneg %p234
      $region58: #{discriminator_forward.1} parent=55 // pred_check_branch
        %2546 = sbr.rel (%p2544) target = $region60
      $region59: #{discriminator_forward.1} parent=55 // pred_region
        %s2547 = smul.u32 2, %s22
      $region60: #{discriminator_forward.1} parent=55 // pred_fallthru
        _
    $region56: #{discriminator_forward.1} parent=5 // pred_fallthru
      _
    %p2548 = scmp.le.s32.totalorder 2, %s17
    // Predicated region
    $region61: #{discriminator_forward.1} parent=5 // pred_check
      %p2549 = pneg %p2548
    $region62: #{discriminator_forward.1} parent=5 // pred_check_branch
      %2551 = sbr.rel (%p2549) target = $region64
    $region63: #{discriminator_forward.1} parent=5 // pred_region
      %s2552 = ssub.s32 %s17, 2
      // Predicated region
      $region65: #{discriminator_forward.1} parent=63 // pred_check
        %p2553 = pneg %p240
      $region66: #{discriminator_forward.1} parent=63 // pred_check_branch
        %2555 = sbr.rel (%p2553) target = $region68
      $region67: #{discriminator_forward.1} parent=63 // pred_region
        %s2556 = smul.u32 2, %s23
        %p2557 = scmp.lt.s32.totalorder %s2556, 3
        %s2558 = scalar_select %p2557, %s2556, 3
        %s2559 = scalar_lea.vmem %s9, %s2558
      $region68: #{discriminator_forward.1} parent=63 // pred_fallthru
        _
    $region64: #{discriminator_forward.1} parent=5 // pred_fallthru
      _
  $region6: #{discriminator_forward.1} parent=0 // loop_footer
    %s21 = sadd.s32 1, %s17
  $region7: #{discriminator_forward.1} parent=0 // loop_footer_branch
    %16 = sbr.rel target = $region3
  $region8: #{discriminator_forward.1} parent=0 // loop_exit
    _

</llo_original>
